<compile_context>
chip_gen: v5e
topology: v5e:2x2
jax: 0.10.0
libtpu: 0.0.40
codegen_flags: <defaults>
</compile_context>

<pallas_src>
import functools

import jax
import jax.numpy as jnp
from jax import lax
from jax.experimental import pallas as pl
from jax.experimental.pallas import tpu as pltpu


def _attention_kernel(x_q_ref, x_kv_ref,
                      wq_ref, wk_ref, wv_ref,
                      bq_ref, bk_ref, bv_ref,
                      wp_ref, bp_ref,
                      o_ref,
                      k_scr, v_scr,
                      *, n_heads):
    """Grid = (batch, q_tile).

    x_q_ref : (1, TQ, D)   query-token tile of x
    x_kv_ref: (1, N, D)    full token block of x (same block for all qi)
    wq/wk/wv: (H, D, hd)   bf16; softmax scale folded into wq
    bq/bk/bv: (H, 1, hd)   f32;  softmax scale folded into bq
    wp_ref  : (H, hd, D)   bf16 output-projection weight, head-major rows
    bp_ref  : (1, D)       f32
    o_ref   : (1, TQ, D)
    k_scr   : (H, N, hd)   bf16 VMEM scratch, persists across q tiles
    v_scr   : (H, N, hd)   bf16 VMEM scratch
    """
    qi = pl.program_id(1)

    # ---- K / V projection: once per batch element, reused for all q tiles.
    @pl.when(qi == 0)
    def _():
        x_full = x_kv_ref[0].astype(jnp.bfloat16)                  # (N, D)
        for h in range(n_heads):                                   # static unroll
            k_h = jnp.dot(x_full, wk_ref[h],
                          preferred_element_type=jnp.float32) + bk_ref[h]
            v_h = jnp.dot(x_full, wv_ref[h],
                          preferred_element_type=jnp.float32) + bv_ref[h]
            k_scr[h] = k_h.astype(jnp.bfloat16)
            v_scr[h] = v_h.astype(jnp.bfloat16)

    # ---- Per-head attention + accumulated output projection.
    x_q = x_q_ref[0].astype(jnp.bfloat16)                          # (TQ, D)
    tq = x_q_ref.shape[1]
    d = o_ref.shape[2]

    acc = jnp.zeros((tq, d), jnp.float32)
    for h in range(n_heads):                                       # static unroll
        # scale is already folded into wq / bq.
        q_h = (jnp.dot(x_q, wq_ref[h], preferred_element_type=jnp.float32)
               + bq_ref[h]).astype(jnp.bfloat16)                   # (TQ, hd)
        k_h = k_scr[h]                                             # (N, hd)
        v_h = v_scr[h]                                             # (N, hd)

        # Scores: contract head_dim of both operands (no materialized k^T).
        s = lax.dot_general(q_h, k_h, (((1,), (1,)), ((), ())),
                            preferred_element_type=jnp.float32)    # (TQ, N)

        # Numerically stable softmax; normalization deferred to the p@v result.
        m = jnp.max(s, axis=-1, keepdims=True)
        p = jnp.exp(s - m)
        l = jnp.sum(p, axis=-1, keepdims=True)
        wa = jnp.dot(p.astype(jnp.bfloat16), v_h,
                     preferred_element_type=jnp.float32)           # (TQ, hd)
        wa = (wa * pl.reciprocal(l, approx=True)).astype(jnp.bfloat16)

        # Output projection of this head's rows, accumulated in f32 (no concat).
        acc = acc + jnp.dot(wa, wp_ref[h],
                            preferred_element_type=jnp.float32)    # (TQ, D)

    # attn_drop / proj_drop have p = 0.0 -> identity.
    o_ref[0] = (acc + bp_ref[...]).astype(o_ref.dtype)


def _pick_q_tile(n):
    """Largest query tile <= 256 that is a multiple of 8 and divides n."""
    if n <= 256:
        return n
    for t in range(256, 7, -8):
        if n % t == 0:
            return t
    return n


def attention_forward(x, w_qkv, b_qkv, w_proj, b_proj, *, n_heads, q_tile=None):
    """x: (B, N, D).  Weights follow torch.nn.Linear convention:
    w_qkv: (3D, D), b_qkv: (3D,), w_proj: (D, D), b_proj: (D,)."""
    x = jnp.asarray(x)
    B, N, D = x.shape
    assert D % n_heads == 0
    hd = D // n_heads
    scale = hd ** -0.5

    tq = _pick_q_tile(N) if q_tile is None else q_tile
    assert N % tq == 0 and (tq == N or tq % 8 == 0)
    nq = N // tq

    w_qkv = jnp.asarray(w_qkv, jnp.float32)
    b_qkv = jnp.asarray(b_qkv, jnp.float32)
    w_proj = jnp.asarray(w_proj, jnp.float32)
    b_proj = jnp.asarray(b_proj, jnp.float32)

    def head_major(w):  # (D, D) torch weight -> (H, D, hd) so q_h = x @ w_h
        return w.T.reshape(D, n_heads, hd).transpose(1, 0, 2)

    # Fold softmax scale into the Q projection; cast matmul weights to bf16.
    wq = (head_major(w_qkv[0 * D:1 * D]) * scale).astype(jnp.bfloat16)
    wk = head_major(w_qkv[1 * D:2 * D]).astype(jnp.bfloat16)
    wv = head_major(w_qkv[2 * D:3 * D]).astype(jnp.bfloat16)
    bq = (b_qkv[0 * D:1 * D] * scale).reshape(n_heads, 1, hd)
    bk = b_qkv[1 * D:2 * D].reshape(n_heads, 1, hd)
    bv = b_qkv[2 * D:3 * D].reshape(n_heads, 1, hd)

    # Output projection, head-major on the contraction side (no concat needed).
    wp = w_proj.T.reshape(n_heads, hd, D).astype(jnp.bfloat16)
    bp = b_proj.reshape(1, D)

    kernel = functools.partial(_attention_kernel, n_heads=n_heads)
    const3 = lambda b, qi: (0, 0, 0)

    return pl.pallas_call(
        kernel,
        out_shape=jax.ShapeDtypeStruct((B, N, D), x.dtype),
        grid_spec=pltpu.PrefetchScalarGridSpec(
            num_scalar_prefetch=0,
            grid=(B, nq),
            in_specs=[
                pl.BlockSpec((1, tq, D), lambda b, qi: (b, qi, 0)),   # x (q tile)
                pl.BlockSpec((1, N, D), lambda b, qi: (b, 0, 0)),     # x (full, K/V)
                pl.BlockSpec((n_heads, D, hd), const3),               # wq (scaled)
                pl.BlockSpec((n_heads, D, hd), const3),               # wk
                pl.BlockSpec((n_heads, D, hd), const3),               # wv
                pl.BlockSpec((n_heads, 1, hd), const3),               # bq (scaled)
                pl.BlockSpec((n_heads, 1, hd), const3),               # bk
                pl.BlockSpec((n_heads, 1, hd), const3),               # bv
                pl.BlockSpec((n_heads, hd, D), const3),               # wproj
                pl.BlockSpec((1, D), lambda b, qi: (0, 0)),           # bproj
            ],
            out_specs=pl.BlockSpec((1, tq, D), lambda b, qi: (b, qi, 0)),
            scratch_shapes=[
                pltpu.VMEM((n_heads, N, hd), jnp.bfloat16),           # K cache
                pltpu.VMEM((n_heads, N, hd), jnp.bfloat16),           # V cache
            ],
        ),
        compiler_params=pltpu.CompilerParams(
            dimension_semantics=("parallel", "arbitrary"),
            vmem_limit_bytes=64 * 1024 * 1024,
        ),
    )(x, x, wq, wk, wv, bq, bk, bv, wp, bp)


def attention_reference(x, w_qkv, b_qkv, w_proj, b_proj, *, n_heads):
    """Pure-JAX f32 reference matching the torch module semantics."""
    B, N, D = x.shape
    hd = D // n_heads
    scale = hd ** -0.5
    qkv = jnp.einsum("bnd,ed->bne", x, w_qkv) + b_qkv             # (B, N, 3D)
    qkv = qkv.reshape(B, N, 3, n_heads, hd).transpose(2, 0, 3, 1, 4)
    q, k, v = qkv[0], qkv[1], qkv[2]                              # (B, H, N, hd)
    attn = jax.nn.softmax(jnp.einsum("bhqd,bhkd->bhqk", q, k) * scale, axis=-1)
    wa = jnp.einsum("bhqk,bhkd->bhqd", attn, v)                   # (B, H, N, hd)
    wa = wa.transpose(0, 2, 1, 3).reshape(B, N, D)
    return jnp.einsum("bnd,ed->bne", wa, w_proj) + b_proj


if __name__ == "__main__":
    B, N, dim, n_heads = 2, 8, 32, 4

    key = jax.random.PRNGKey(0)
    kx, kwq, kbq, kwp, kbp = jax.random.split(key, 5)

    x = jax.random.normal(kx, (B, N, dim), dtype=jnp.float32)
    w_qkv = 0.02 * jax.random.normal(kwq, (3 * dim, dim), dtype=jnp.float32)
    b_qkv = 0.01 * jax.random.normal(kbq, (3 * dim,), dtype=jnp.float32)
    w_proj = 0.02 * jax.random.normal(kwp, (dim, dim), dtype=jnp.float32)
    b_proj = 0.01 * jax.random.normal(kbp, (dim,), dtype=jnp.float32)

    out = attention_forward(x, w_qkv, b_qkv, w_proj, b_proj, n_heads=n_heads)
    out = jax.block_until_ready(out)
    ref = attention_reference(x, w_qkv, b_qkv, w_proj, b_proj, n_heads=n_heads)
    assert out.shape == (B, N, dim)
    # bf16 matmul operands + approx softmax reciprocal -> loosened tolerance.
    assert jnp.allclose(out, ref, atol=2e-2, rtol=2e-2), \
        float(jnp.max(jnp.abs(out - ref)))

    # Exercise the q-tiling + K/V scratch-reuse path (nq > 1).
    x2 = jax.random.normal(jax.random.PRNGKey(1), (2, 16, dim), dtype=jnp.float32)
    out2 = attention_forward(x2, w_qkv, b_qkv, w_proj, b_proj,
                             n_heads=n_heads, q_tile=8)
    out2 = jax.block_until_ready(out2)
    ref2 = attention_reference(x2, w_qkv, b_qkv, w_proj, b_proj, n_heads=n_heads)
    assert jnp.allclose(out2, ref2, atol=2e-2, rtol=2e-2), \
        float(jnp.max(jnp.abs(out2 - ref2)))

    print("KERNEL_OK")
</pallas_src>

<mosaic_0001>
module attributes {stable_mosaic.version = 11 : i64} {
  func.func @_attention_kernel(%arg0: i32, %arg1: i32, %arg2: memref<1x8x32xf32, #tpu.memory_space<vmem>>, %arg3: memref<1x8x32xf32, #tpu.memory_space<vmem>>, %arg4: memref<4x32x8xbf16, #tpu.memory_space<vmem>>, %arg5: memref<4x32x8xbf16, #tpu.memory_space<vmem>>, %arg6: memref<4x32x8xbf16, #tpu.memory_space<vmem>>, %arg7: memref<4x1x8xf32, #tpu.memory_space<vmem>>, %arg8: memref<4x1x8xf32, #tpu.memory_space<vmem>>, %arg9: memref<4x1x8xf32, #tpu.memory_space<vmem>>, %arg10: memref<4x8x32xbf16, #tpu.memory_space<vmem>>, %arg11: memref<1x32xf32, #tpu.memory_space<vmem>>, %arg12: memref<1x8x32xf32, #tpu.memory_space<vmem>>, %arg13: memref<4x8x8xbf16, #tpu.memory_space<vmem>>, %arg14: memref<4x8x8xbf16, #tpu.memory_space<vmem>>) attributes {dimension_semantics = [#tpu.dimension_semantics<parallel>, #tpu.dimension_semantics<arbitrary>], iteration_bounds = array<i64: 2, 1>, scalar_prefetch = 0 : i64, scratch_operands = 2 : i64, tpu.core_type = #tpu.core_type<tc>, window_params = [{transform_indices = @transform_0, window_bounds = array<i64: 1, 8, 32>}, {transform_indices = @transform_1, window_bounds = array<i64: 1, 8, 32>}, {pipeline_mode = #tpu.pipeline_mode<synchronous>, transform_indices = @transform_2, window_bounds = array<i64: 4, 32, 8>}, {pipeline_mode = #tpu.pipeline_mode<synchronous>, transform_indices = @transform_3, window_bounds = array<i64: 4, 32, 8>}, {pipeline_mode = #tpu.pipeline_mode<synchronous>, transform_indices = @transform_4, window_bounds = array<i64: 4, 32, 8>}, {pipeline_mode = #tpu.pipeline_mode<synchronous>, transform_indices = @transform_5, window_bounds = array<i64: 4, 1, 8>}, {pipeline_mode = #tpu.pipeline_mode<synchronous>, transform_indices = @transform_6, window_bounds = array<i64: 4, 1, 8>}, {pipeline_mode = #tpu.pipeline_mode<synchronous>, transform_indices = @transform_7, window_bounds = array<i64: 4, 1, 8>}, {pipeline_mode = #tpu.pipeline_mode<synchronous>, transform_indices = @transform_8, window_bounds = array<i64: 4, 8, 32>}, {pipeline_mode = #tpu.pipeline_mode<synchronous>, transform_indices = @transform_9, window_bounds = array<i64: 1, 32>}, {transform_indices = @transform_10, window_bounds = array<i64: 1, 8, 32>}]} {
    %c0_i32 = arith.constant 0 : i32
    %0 = arith.cmpi eq, %arg1, %c0_i32 : i32
    %1 = arith.extui %0 : i1 to i32
    %c0_i32_0 = arith.constant 0 : i32
    %2 = arith.cmpi ne, %1, %c0_i32_0 : i32
    scf.if %2 {
      %c0_89 = arith.constant 0 : index
      %c0_90 = arith.constant 0 : index
      %c0_91 = arith.constant 0 : index
      %133 = vector.load %arg3[%c0_89, %c0_90, %c0_91] : memref<1x8x32xf32, #tpu.memory_space<vmem>>, vector<1x8x32xf32>
      %134 = vector.shape_cast %133 : vector<1x8x32xf32> to vector<8x32xf32>
      %135 = arith.truncf %134 : vector<8x32xf32> to vector<8x32xbf16>
      %c0_92 = arith.constant 0 : index
      %c0_93 = arith.constant 0 : index
      %c0_94 = arith.constant 0 : index
      %136 = vector.load %arg5[%c0_92, %c0_93, %c0_94] : memref<4x32x8xbf16, #tpu.memory_space<vmem>>, vector<1x32x8xbf16>
      %137 = vector.shape_cast %136 : vector<1x32x8xbf16> to vector<32x8xbf16>
      %cst_95 = arith.constant dense<0.000000e+00> : vector<8x8xf32>
      %138 = tpu.matmul %135, %137, %cst_95 {dimension_numbers = #tpu.dot_dimension_numbers<[1], [0], [0], [1], [0, 0, 1, 1], [], []>} : vector<8x32xbf16>, vector<32x8xbf16>, vector<8x8xf32> -> vector<8x8xf32>
      %c0_96 = arith.constant 0 : index
      %c0_97 = arith.constant 0 : index
      %c0_98 = arith.constant 0 : index
      %139 = vector.load %arg8[%c0_96, %c0_97, %c0_98] : memref<4x1x8xf32, #tpu.memory_space<vmem>>, vector<1x1x8xf32>
      %140 = vector.shape_cast %139 : vector<1x1x8xf32> to vector<1x8xf32>
      %141 = vector.broadcast %140 : vector<1x8xf32> to vector<8x8xf32>
      %142 = arith.addf %138, %141 : vector<8x8xf32>
      %c0_99 = arith.constant 0 : index
      %c0_100 = arith.constant 0 : index
      %c0_101 = arith.constant 0 : index
      %143 = vector.load %arg6[%c0_99, %c0_100, %c0_101] : memref<4x32x8xbf16, #tpu.memory_space<vmem>>, vector<1x32x8xbf16>
      %144 = vector.shape_cast %143 : vector<1x32x8xbf16> to vector<32x8xbf16>
      %cst_102 = arith.constant dense<0.000000e+00> : vector<8x8xf32>
      %145 = tpu.matmul %135, %144, %cst_102 {dimension_numbers = #tpu.dot_dimension_numbers<[1], [0], [0], [1], [0, 0, 1, 1], [], []>} : vector<8x32xbf16>, vector<32x8xbf16>, vector<8x8xf32> -> vector<8x8xf32>
      %c0_103 = arith.constant 0 : index
      %c0_104 = arith.constant 0 : index
      %c0_105 = arith.constant 0 : index
      %146 = vector.load %arg9[%c0_103, %c0_104, %c0_105] : memref<4x1x8xf32, #tpu.memory_space<vmem>>, vector<1x1x8xf32>
      %147 = vector.shape_cast %146 : vector<1x1x8xf32> to vector<1x8xf32>
      %148 = vector.broadcast %147 : vector<1x8xf32> to vector<8x8xf32>
      %149 = arith.addf %145, %148 : vector<8x8xf32>
      %150 = arith.truncf %142 : vector<8x8xf32> to vector<8x8xbf16>
      %c0_106 = arith.constant 0 : index
      %c0_107 = arith.constant 0 : index
      %c0_108 = arith.constant 0 : index
      %151 = vector.load %arg13[%c0_106, %c0_107, %c0_108] : memref<4x8x8xbf16, #tpu.memory_space<vmem>>, vector<1x8x8xbf16>
      %152 = vector.shape_cast %151 : vector<1x8x8xbf16> to vector<8x8xbf16>
      %153 = vector.shape_cast %150 : vector<8x8xbf16> to vector<1x8x8xbf16>
      tpu.vector_store %arg13[%c0_106, %c0_107, %c0_108], %153 {strides = array<i32>} : memref<4x8x8xbf16, #tpu.memory_space<vmem>>, vector<1x8x8xbf16>,
      %154 = arith.truncf %149 : vector<8x8xf32> to vector<8x8xbf16>
      %c0_109 = arith.constant 0 : index
      %c0_110 = arith.constant 0 : index
      %c0_111 = arith.constant 0 : index
      %155 = vector.load %arg14[%c0_109, %c0_110, %c0_111] : memref<4x8x8xbf16, #tpu.memory_space<vmem>>, vector<1x8x8xbf16>
      %156 = vector.shape_cast %155 : vector<1x8x8xbf16> to vector<8x8xbf16>
      %157 = vector.shape_cast %154 : vector<8x8xbf16> to vector<1x8x8xbf16>
      tpu.vector_store %arg14[%c0_109, %c0_110, %c0_111], %157 {strides = array<i32>} : memref<4x8x8xbf16, #tpu.memory_space<vmem>>, vector<1x8x8xbf16>,
      %c1_112 = arith.constant 1 : index
      %c0_113 = arith.constant 0 : index
      %c0_114 = arith.constant 0 : index
      %158 = vector.load %arg5[%c1_112, %c0_113, %c0_114] : memref<4x32x8xbf16, #tpu.memory_space<vmem>>, vector<1x32x8xbf16>
      %159 = vector.shape_cast %158 : vector<1x32x8xbf16> to vector<32x8xbf16>
      %cst_115 = arith.constant dense<0.000000e+00> : vector<8x8xf32>
      %160 = tpu.matmul %135, %159, %cst_115 {dimension_numbers = #tpu.dot_dimension_numbers<[1], [0], [0], [1], [0, 0, 1, 1], [], []>} : vector<8x32xbf16>, vector<32x8xbf16>, vector<8x8xf32> -> vector<8x8xf32>
      %c1_116 = arith.constant 1 : index
      %c0_117 = arith.constant 0 : index
      %c0_118 = arith.constant 0 : index
      %161 = vector.load %arg8[%c1_116, %c0_117, %c0_118] : memref<4x1x8xf32, #tpu.memory_space<vmem>>, vector<1x1x8xf32>
      %162 = vector.shape_cast %161 : vector<1x1x8xf32> to vector<1x8xf32>
      %163 = vector.broadcast %162 : vector<1x8xf32> to vector<8x8xf32>
      %164 = arith.addf %160, %163 : vector<8x8xf32>
      %c1_119 = arith.constant 1 : index
      %c0_120 = arith.constant 0 : index
      %c0_121 = arith.constant 0 : index
      %165 = vector.load %arg6[%c1_119, %c0_120, %c0_121] : memref<4x32x8xbf16, #tpu.memory_space<vmem>>, vector<1x32x8xbf16>
      %166 = vector.shape_cast %165 : vector<1x32x8xbf16> to vector<32x8xbf16>
      %cst_122 = arith.constant dense<0.000000e+00> : vector<8x8xf32>
      %167 = tpu.matmul %135, %166, %cst_122 {dimension_numbers = #tpu.dot_dimension_numbers<[1], [0], [0], [1], [0, 0, 1, 1], [], []>} : vector<8x32xbf16>, vector<32x8xbf16>, vector<8x8xf32> -> vector<8x8xf32>
      %c1_123 = arith.constant 1 : index
      %c0_124 = arith.constant 0 : index
      %c0_125 = arith.constant 0 : index
      %168 = vector.load %arg9[%c1_123, %c0_124, %c0_125] : memref<4x1x8xf32, #tpu.memory_space<vmem>>, vector<1x1x8xf32>
      %169 = vector.shape_cast %168 : vector<1x1x8xf32> to vector<1x8xf32>
      %170 = vector.broadcast %169 : vector<1x8xf32> to vector<8x8xf32>
      %171 = arith.addf %167, %170 : vector<8x8xf32>
      %172 = arith.truncf %164 : vector<8x8xf32> to vector<8x8xbf16>
      %c1_126 = arith.constant 1 : index
      %c0_127 = arith.constant 0 : index
      %c0_128 = arith.constant 0 : index
      %173 = vector.load %arg13[%c1_126, %c0_127, %c0_128] : memref<4x8x8xbf16, #tpu.memory_space<vmem>>, vector<1x8x8xbf16>
      %174 = vector.shape_cast %173 : vector<1x8x8xbf16> to vector<8x8xbf16>
      %175 = vector.shape_cast %172 : vector<8x8xbf16> to vector<1x8x8xbf16>
      tpu.vector_store %arg13[%c1_126, %c0_127, %c0_128], %175 {strides = array<i32>} : memref<4x8x8xbf16, #tpu.memory_space<vmem>>, vector<1x8x8xbf16>,
      %176 = arith.truncf %171 : vector<8x8xf32> to vector<8x8xbf16>
      %c1_129 = arith.constant 1 : index
      %c0_130 = arith.constant 0 : index
      %c0_131 = arith.constant 0 : index
      %177 = vector.load %arg14[%c1_129, %c0_130, %c0_131] : memref<4x8x8xbf16, #tpu.memory_space<vmem>>, vector<1x8x8xbf16>
      %178 = vector.shape_cast %177 : vector<1x8x8xbf16> to vector<8x8xbf16>
      %179 = vector.shape_cast %176 : vector<8x8xbf16> to vector<1x8x8xbf16>
      tpu.vector_store %arg14[%c1_129, %c0_130, %c0_131], %179 {strides = array<i32>} : memref<4x8x8xbf16, #tpu.memory_space<vmem>>, vector<1x8x8xbf16>,
      %c2_132 = arith.constant 2 : index
      %c0_133 = arith.constant 0 : index
      %c0_134 = arith.constant 0 : index
      %180 = vector.load %arg5[%c2_132, %c0_133, %c0_134] : memref<4x32x8xbf16, #tpu.memory_space<vmem>>, vector<1x32x8xbf16>
      %181 = vector.shape_cast %180 : vector<1x32x8xbf16> to vector<32x8xbf16>
      %cst_135 = arith.constant dense<0.000000e+00> : vector<8x8xf32>
      %182 = tpu.matmul %135, %181, %cst_135 {dimension_numbers = #tpu.dot_dimension_numbers<[1], [0], [0], [1], [0, 0, 1, 1], [], []>} : vector<8x32xbf16>, vector<32x8xbf16>, vector<8x8xf32> -> vector<8x8xf32>
      %c2_136 = arith.constant 2 : index
      %c0_137 = arith.constant 0 : index
      %c0_138 = arith.constant 0 : index
      %183 = vector.load %arg8[%c2_136, %c0_137, %c0_138] : memref<4x1x8xf32, #tpu.memory_space<vmem>>, vector<1x1x8xf32>
      %184 = vector.shape_cast %183 : vector<1x1x8xf32> to vector<1x8xf32>
      %185 = vector.broadcast %184 : vector<1x8xf32> to vector<8x8xf32>
      %186 = arith.addf %182, %185 : vector<8x8xf32>
      %c2_139 = arith.constant 2 : index
      %c0_140 = arith.constant 0 : index
      %c0_141 = arith.constant 0 : index
      %187 = vector.load %arg6[%c2_139, %c0_140, %c0_141] : memref<4x32x8xbf16, #tpu.memory_space<vmem>>, vector<1x32x8xbf16>
      %188 = vector.shape_cast %187 : vector<1x32x8xbf16> to vector<32x8xbf16>
      %cst_142 = arith.constant dense<0.000000e+00> : vector<8x8xf32>
      %189 = tpu.matmul %135, %188, %cst_142 {dimension_numbers = #tpu.dot_dimension_numbers<[1], [0], [0], [1], [0, 0, 1, 1], [], []>} : vector<8x32xbf16>, vector<32x8xbf16>, vector<8x8xf32> -> vector<8x8xf32>
      %c2_143 = arith.constant 2 : index
      %c0_144 = arith.constant 0 : index
      %c0_145 = arith.constant 0 : index
      %190 = vector.load %arg9[%c2_143, %c0_144, %c0_145] : memref<4x1x8xf32, #tpu.memory_space<vmem>>, vector<1x1x8xf32>
      %191 = vector.shape_cast %190 : vector<1x1x8xf32> to vector<1x8xf32>
      %192 = vector.broadcast %191 : vector<1x8xf32> to vector<8x8xf32>
      %193 = arith.addf %189, %192 : vector<8x8xf32>
      %194 = arith.truncf %186 : vector<8x8xf32> to vector<8x8xbf16>
      %c2_146 = arith.constant 2 : index
      %c0_147 = arith.constant 0 : index
      %c0_148 = arith.constant 0 : index
      %195 = vector.load %arg13[%c2_146, %c0_147, %c0_148] : memref<4x8x8xbf16, #tpu.memory_space<vmem>>, vector<1x8x8xbf16>
      %196 = vector.shape_cast %195 : vector<1x8x8xbf16> to vector<8x8xbf16>
      %197 = vector.shape_cast %194 : vector<8x8xbf16> to vector<1x8x8xbf16>
      tpu.vector_store %arg13[%c2_146, %c0_147, %c0_148], %197 {strides = array<i32>} : memref<4x8x8xbf16, #tpu.memory_space<vmem>>, vector<1x8x8xbf16>,
      %198 = arith.truncf %193 : vector<8x8xf32> to vector<8x8xbf16>
      %c2_149 = arith.constant 2 : index
      %c0_150 = arith.constant 0 : index
      %c0_151 = arith.constant 0 : index
      %199 = vector.load %arg14[%c2_149, %c0_150, %c0_151] : memref<4x8x8xbf16, #tpu.memory_space<vmem>>, vector<1x8x8xbf16>
      %200 = vector.shape_cast %199 : vector<1x8x8xbf16> to vector<8x8xbf16>
      %201 = vector.shape_cast %198 : vector<8x8xbf16> to vector<1x8x8xbf16>
      tpu.vector_store %arg14[%c2_149, %c0_150, %c0_151], %201 {strides = array<i32>} : memref<4x8x8xbf16, #tpu.memory_space<vmem>>, vector<1x8x8xbf16>,
      %c3_152 = arith.constant 3 : index
      %c0_153 = arith.constant 0 : index
      %c0_154 = arith.constant 0 : index
      %202 = vector.load %arg5[%c3_152, %c0_153, %c0_154] : memref<4x32x8xbf16, #tpu.memory_space<vmem>>, vector<1x32x8xbf16>
      %203 = vector.shape_cast %202 : vector<1x32x8xbf16> to vector<32x8xbf16>
      %cst_155 = arith.constant dense<0.000000e+00> : vector<8x8xf32>
      %204 = tpu.matmul %135, %203, %cst_155 {dimension_numbers = #tpu.dot_dimension_numbers<[1], [0], [0], [1], [0, 0, 1, 1], [], []>} : vector<8x32xbf16>, vector<32x8xbf16>, vector<8x8xf32> -> vector<8x8xf32>
      %c3_156 = arith.constant 3 : index
      %c0_157 = arith.constant 0 : index
      %c0_158 = arith.constant 0 : index
      %205 = vector.load %arg8[%c3_156, %c0_157, %c0_158] : memref<4x1x8xf32, #tpu.memory_space<vmem>>, vector<1x1x8xf32>
      %206 = vector.shape_cast %205 : vector<1x1x8xf32> to vector<1x8xf32>
      %207 = vector.broadcast %206 : vector<1x8xf32> to vector<8x8xf32>
      %208 = arith.addf %204, %207 : vector<8x8xf32>
      %c3_159 = arith.constant 3 : index
      %c0_160 = arith.constant 0 : index
      %c0_161 = arith.constant 0 : index
      %209 = vector.load %arg6[%c3_159, %c0_160, %c0_161] : memref<4x32x8xbf16, #tpu.memory_space<vmem>>, vector<1x32x8xbf16>
      %210 = vector.shape_cast %209 : vector<1x32x8xbf16> to vector<32x8xbf16>
      %cst_162 = arith.constant dense<0.000000e+00> : vector<8x8xf32>
      %211 = tpu.matmul %135, %210, %cst_162 {dimension_numbers = #tpu.dot_dimension_numbers<[1], [0], [0], [1], [0, 0, 1, 1], [], []>} : vector<8x32xbf16>, vector<32x8xbf16>, vector<8x8xf32> -> vector<8x8xf32>
      %c3_163 = arith.constant 3 : index
      %c0_164 = arith.constant 0 : index
      %c0_165 = arith.constant 0 : index
      %212 = vector.load %arg9[%c3_163, %c0_164, %c0_165] : memref<4x1x8xf32, #tpu.memory_space<vmem>>, vector<1x1x8xf32>
      %213 = vector.shape_cast %212 : vector<1x1x8xf32> to vector<1x8xf32>
      %214 = vector.broadcast %213 : vector<1x8xf32> to vector<8x8xf32>
      %215 = arith.addf %211, %214 : vector<8x8xf32>
      %216 = arith.truncf %208 : vector<8x8xf32> to vector<8x8xbf16>
      %c3_166 = arith.constant 3 : index
      %c0_167 = arith.constant 0 : index
      %c0_168 = arith.constant 0 : index
      %217 = vector.load %arg13[%c3_166, %c0_167, %c0_168] : memref<4x8x8xbf16, #tpu.memory_space<vmem>>, vector<1x8x8xbf16>
      %218 = vector.shape_cast %217 : vector<1x8x8xbf16> to vector<8x8xbf16>
      %219 = vector.shape_cast %216 : vector<8x8xbf16> to vector<1x8x8xbf16>
      tpu.vector_store %arg13[%c3_166, %c0_167, %c0_168], %219 {strides = array<i32>} : memref<4x8x8xbf16, #tpu.memory_space<vmem>>, vector<1x8x8xbf16>,
      %220 = arith.truncf %215 : vector<8x8xf32> to vector<8x8xbf16>
      %c3_169 = arith.constant 3 : index
      %c0_170 = arith.constant 0 : index
      %c0_171 = arith.constant 0 : index
      %221 = vector.load %arg14[%c3_169, %c0_170, %c0_171] : memref<4x8x8xbf16, #tpu.memory_space<vmem>>, vector<1x8x8xbf16>
      %222 = vector.shape_cast %221 : vector<1x8x8xbf16> to vector<8x8xbf16>
      %223 = vector.shape_cast %220 : vector<8x8xbf16> to vector<1x8x8xbf16>
      tpu.vector_store %arg14[%c3_169, %c0_170, %c0_171], %223 {strides = array<i32>} : memref<4x8x8xbf16, #tpu.memory_space<vmem>>, vector<1x8x8xbf16>,
    } else {
    }
    %c0 = arith.constant 0 : index
    %c0_1 = arith.constant 0 : index
    %c0_2 = arith.constant 0 : index
    %3 = vector.load %arg2[%c0, %c0_1, %c0_2] : memref<1x8x32xf32, #tpu.memory_space<vmem>>, vector<1x8x32xf32>
    %4 = vector.shape_cast %3 : vector<1x8x32xf32> to vector<8x32xf32>
    %5 = arith.truncf %4 : vector<8x32xf32> to vector<8x32xbf16>
    %cst = arith.constant 0.000000e+00 : f32
    %6 = vector.broadcast %cst : f32 to vector<8x32xf32>
    %c0_3 = arith.constant 0 : index
    %c0_4 = arith.constant 0 : index
    %c0_5 = arith.constant 0 : index
    %7 = vector.load %arg4[%c0_3, %c0_4, %c0_5] : memref<4x32x8xbf16, #tpu.memory_space<vmem>>, vector<1x32x8xbf16>
    %8 = vector.shape_cast %7 : vector<1x32x8xbf16> to vector<32x8xbf16>
    %cst_6 = arith.constant dense<0.000000e+00> : vector<8x8xf32>
    %9 = tpu.matmul %5, %8, %cst_6 {dimension_numbers = #tpu.dot_dimension_numbers<[1], [0], [0], [1], [0, 0, 1, 1], [], []>} : vector<8x32xbf16>, vector<32x8xbf16>, vector<8x8xf32> -> vector<8x8xf32>
    %c0_7 = arith.constant 0 : index
    %c0_8 = arith.constant 0 : index
    %c0_9 = arith.constant 0 : index
    %10 = vector.load %arg7[%c0_7, %c0_8, %c0_9] : memref<4x1x8xf32, #tpu.memory_space<vmem>>, vector<1x1x8xf32>
    %11 = vector.shape_cast %10 : vector<1x1x8xf32> to vector<1x8xf32>
    %12 = vector.broadcast %11 : vector<1x8xf32> to vector<8x8xf32>
    %13 = arith.addf %9, %12 : vector<8x8xf32>
    %14 = arith.truncf %13 : vector<8x8xf32> to vector<8x8xbf16>
    %c0_10 = arith.constant 0 : index
    %c0_11 = arith.constant 0 : index
    %c0_12 = arith.constant 0 : index
    %15 = vector.load %arg13[%c0_10, %c0_11, %c0_12] : memref<4x8x8xbf16, #tpu.memory_space<vmem>>, vector<1x8x8xbf16>
    %16 = vector.shape_cast %15 : vector<1x8x8xbf16> to vector<8x8xbf16>
    %c0_13 = arith.constant 0 : index
    %c0_14 = arith.constant 0 : index
    %c0_15 = arith.constant 0 : index
    %17 = vector.load %arg14[%c0_13, %c0_14, %c0_15] : memref<4x8x8xbf16, #tpu.memory_space<vmem>>, vector<1x8x8xbf16>
    %18 = vector.shape_cast %17 : vector<1x8x8xbf16> to vector<8x8xbf16>
    %cst_16 = arith.constant dense<0.000000e+00> : vector<8x8xf32>
    %19 = tpu.matmul %14, %16, %cst_16 {dimension_numbers = #tpu.dot_dimension_numbers<[1], [1], [0], [0], [0, 0, 1, 0], [], []>} : vector<8x8xbf16>, vector<8x8xbf16>, vector<8x8xf32> -> vector<8x8xf32>
    %cst_17 = arith.constant dense<0xFF800000> : vector<8xf32>
    %20 = vector.multi_reduction <maximumf>, %19, %cst_17 [1] : vector<8x8xf32> to vector<8xf32>
    %21 = vector.shape_cast %20 : vector<8xf32> to vector<8x1xf32>
    %22 = vector.broadcast %21 : vector<8x1xf32> to vector<8x8xf32>
    %23 = arith.subf %19, %22 : vector<8x8xf32>
    %24 = math.exp %23 : vector<8x8xf32>
    %cst_18 = arith.constant dense<0.000000e+00> : vector<8xf32>
    %25 = vector.multi_reduction <add>, %24, %cst_18 [1] : vector<8x8xf32> to vector<8xf32>
    %26 = vector.shape_cast %25 : vector<8xf32> to vector<8x1xf32>
    %27 = arith.truncf %24 : vector<8x8xf32> to vector<8x8xbf16>
    %cst_19 = arith.constant dense<0.000000e+00> : vector<8x8xf32>
    %28 = tpu.matmul %27, %18, %cst_19 {dimension_numbers = #tpu.dot_dimension_numbers<[1], [0], [0], [1], [0, 0, 1, 1], [], []>} : vector<8x8xbf16>, vector<8x8xbf16>, vector<8x8xf32> -> vector<8x8xf32>
    %29 = tpu.reciprocal %26 {approx = true} : vector<8x1xf32> -> vector<8x1xf32>
    %30 = vector.broadcast %29 : vector<8x1xf32> to vector<8x8xf32>
    %31 = arith.mulf %28, %30 : vector<8x8xf32>
    %32 = arith.truncf %31 : vector<8x8xf32> to vector<8x8xbf16>
    %c0_20 = arith.constant 0 : index
    %c0_21 = arith.constant 0 : index
    %c0_22 = arith.constant 0 : index
    %33 = vector.load %arg10[%c0_20, %c0_21, %c0_22] : memref<4x8x32xbf16, #tpu.memory_space<vmem>>, vector<1x8x32xbf16>
    %34 = vector.shape_cast %33 : vector<1x8x32xbf16> to vector<8x32xbf16>
    %cst_23 = arith.constant dense<0.000000e+00> : vector<8x32xf32>
    %35 = tpu.matmul %32, %34, %cst_23 {dimension_numbers = #tpu.dot_dimension_numbers<[1], [0], [0], [1], [0, 0, 1, 1], [], []>} : vector<8x8xbf16>, vector<8x32xbf16>, vector<8x32xf32> -> vector<8x32xf32>
    %36 = arith.addf %6, %35 : vector<8x32xf32>
    %c1 = arith.constant 1 : index
    %c0_24 = arith.constant 0 : index
    %c0_25 = arith.constant 0 : index
    %37 = vector.load %arg4[%c1, %c0_24, %c0_25] : memref<4x32x8xbf16, #tpu.memory_space<vmem>>, vector<1x32x8xbf16>
    %38 = vector.shape_cast %37 : vector<1x32x8xbf16> to vector<32x8xbf16>
    %cst_26 = arith.constant dense<0.000000e+00> : vector<8x8xf32>
    %39 = tpu.matmul %5, %38, %cst_26 {dimension_numbers = #tpu.dot_dimension_numbers<[1], [0], [0], [1], [0, 0, 1, 1], [], []>} : vector<8x32xbf16>, vector<32x8xbf16>, vector<8x8xf32> -> vector<8x8xf32>
    %c1_27 = arith.constant 1 : index
    %c0_28 = arith.constant 0 : index
    %c0_29 = arith.constant 0 : index
    %40 = vector.load %arg7[%c1_27, %c0_28, %c0_29] : memref<4x1x8xf32, #tpu.memory_space<vmem>>, vector<1x1x8xf32>
    %41 = vector.shape_cast %40 : vector<1x1x8xf32> to vector<1x8xf32>
    %42 = vector.broadcast %41 : vector<1x8xf32> to vector<8x8xf32>
    %43 = arith.addf %39, %42 : vector<8x8xf32>
    %44 = arith.truncf %43 : vector<8x8xf32> to vector<8x8xbf16>
    %c1_30 = arith.constant 1 : index
    %c0_31 = arith.constant 0 : index
    %c0_32 = arith.constant 0 : index
    %45 = vector.load %arg13[%c1_30, %c0_31, %c0_32] : memref<4x8x8xbf16, #tpu.memory_space<vmem>>, vector<1x8x8xbf16>
    %46 = vector.shape_cast %45 : vector<1x8x8xbf16> to vector<8x8xbf16>
    %c1_33 = arith.constant 1 : index
    %c0_34 = arith.constant 0 : index
    %c0_35 = arith.constant 0 : index
    %47 = vector.load %arg14[%c1_33, %c0_34, %c0_35] : memref<4x8x8xbf16, #tpu.memory_space<vmem>>, vector<1x8x8xbf16>
    %48 = vector.shape_cast %47 : vector<1x8x8xbf16> to vector<8x8xbf16>
    %cst_36 = arith.constant dense<0.000000e+00> : vector<8x8xf32>
    %49 = tpu.matmul %44, %46, %cst_36 {dimension_numbers = #tpu.dot_dimension_numbers<[1], [1], [0], [0], [0, 0, 1, 0], [], []>} : vector<8x8xbf16>, vector<8x8xbf16>, vector<8x8xf32> -> vector<8x8xf32>
    %cst_37 = arith.constant dense<0xFF800000> : vector<8xf32>
    %50 = vector.multi_reduction <maximumf>, %49, %cst_37 [1] : vector<8x8xf32> to vector<8xf32>
    %51 = vector.shape_cast %50 : vector<8xf32> to vector<8x1xf32>
    %52 = vector.broadcast %51 : vector<8x1xf32> to vector<8x8xf32>
    %53 = arith.subf %49, %52 : vector<8x8xf32>
    %54 = math.exp %53 : vector<8x8xf32>
    %cst_38 = arith.constant dense<0.000000e+00> : vector<8xf32>
    %55 = vector.multi_reduction <add>, %54, %cst_38 [1] : vector<8x8xf32> to vector<8xf32>
    %56 = vector.shape_cast %55 : vector<8xf32> to vector<8x1xf32>
    %57 = arith.truncf %54 : vector<8x8xf32> to vector<8x8xbf16>
    %cst_39 = arith.constant dense<0.000000e+00> : vector<8x8xf32>
    %58 = tpu.matmul %57, %48, %cst_39 {dimension_numbers = #tpu.dot_dimension_numbers<[1], [0], [0], [1], [0, 0, 1, 1], [], []>} : vector<8x8xbf16>, vector<8x8xbf16>, vector<8x8xf32> -> vector<8x8xf32>
    %59 = tpu.reciprocal %56 {approx = true} : vector<8x1xf32> -> vector<8x1xf32>
    %60 = vector.broadcast %59 : vector<8x1xf32> to vector<8x8xf32>
    %61 = arith.mulf %58, %60 : vector<8x8xf32>
    %62 = arith.truncf %61 : vector<8x8xf32> to vector<8x8xbf16>
    %c1_40 = arith.constant 1 : index
    %c0_41 = arith.constant 0 : index
    %c0_42 = arith.constant 0 : index
    %63 = vector.load %arg10[%c1_40, %c0_41, %c0_42] : memref<4x8x32xbf16, #tpu.memory_space<vmem>>, vector<1x8x32xbf16>
    %64 = vector.shape_cast %63 : vector<1x8x32xbf16> to vector<8x32xbf16>
    %cst_43 = arith.constant dense<0.000000e+00> : vector<8x32xf32>
    %65 = tpu.matmul %62, %64, %cst_43 {dimension_numbers = #tpu.dot_dimension_numbers<[1], [0], [0], [1], [0, 0, 1, 1], [], []>} : vector<8x8xbf16>, vector<8x32xbf16>, vector<8x32xf32> -> vector<8x32xf32>
    %66 = arith.addf %36, %65 : vector<8x32xf32>
    %c2 = arith.constant 2 : index
    %c0_44 = arith.constant 0 : index
    %c0_45 = arith.constant 0 : index
    %67 = vector.load %arg4[%c2, %c0_44, %c0_45] : memref<4x32x8xbf16, #tpu.memory_space<vmem>>, vector<1x32x8xbf16>
    %68 = vector.shape_cast %67 : vector<1x32x8xbf16> to vector<32x8xbf16>
    %cst_46 = arith.constant dense<0.000000e+00> : vector<8x8xf32>
    %69 = tpu.matmul %5, %68, %cst_46 {dimension_numbers = #tpu.dot_dimension_numbers<[1], [0], [0], [1], [0, 0, 1, 1], [], []>} : vector<8x32xbf16>, vector<32x8xbf16>, vector<8x8xf32> -> vector<8x8xf32>
    %c2_47 = arith.constant 2 : index
    %c0_48 = arith.constant 0 : index
    %c0_49 = arith.constant 0 : index
    %70 = vector.load %arg7[%c2_47, %c0_48, %c0_49] : memref<4x1x8xf32, #tpu.memory_space<vmem>>, vector<1x1x8xf32>
    %71 = vector.shape_cast %70 : vector<1x1x8xf32> to vector<1x8xf32>
    %72 = vector.broadcast %71 : vector<1x8xf32> to vector<8x8xf32>
    %73 = arith.addf %69, %72 : vector<8x8xf32>
    %74 = arith.truncf %73 : vector<8x8xf32> to vector<8x8xbf16>
    %c2_50 = arith.constant 2 : index
    %c0_51 = arith.constant 0 : index
    %c0_52 = arith.constant 0 : index
    %75 = vector.load %arg13[%c2_50, %c0_51, %c0_52] : memref<4x8x8xbf16, #tpu.memory_space<vmem>>, vector<1x8x8xbf16>
    %76 = vector.shape_cast %75 : vector<1x8x8xbf16> to vector<8x8xbf16>
    %c2_53 = arith.constant 2 : index
    %c0_54 = arith.constant 0 : index
    %c0_55 = arith.constant 0 : index
    %77 = vector.load %arg14[%c2_53, %c0_54, %c0_55] : memref<4x8x8xbf16, #tpu.memory_space<vmem>>, vector<1x8x8xbf16>
    %78 = vector.shape_cast %77 : vector<1x8x8xbf16> to vector<8x8xbf16>
    %cst_56 = arith.constant dense<0.000000e+00> : vector<8x8xf32>
    %79 = tpu.matmul %74, %76, %cst_56 {dimension_numbers = #tpu.dot_dimension_numbers<[1], [1], [0], [0], [0, 0, 1, 0], [], []>} : vector<8x8xbf16>, vector<8x8xbf16>, vector<8x8xf32> -> vector<8x8xf32>
    %cst_57 = arith.constant dense<0xFF800000> : vector<8xf32>
    %80 = vector.multi_reduction <maximumf>, %79, %cst_57 [1] : vector<8x8xf32> to vector<8xf32>
    %81 = vector.shape_cast %80 : vector<8xf32> to vector<8x1xf32>
    %82 = vector.broadcast %81 : vector<8x1xf32> to vector<8x8xf32>
    %83 = arith.subf %79, %82 : vector<8x8xf32>
    %84 = math.exp %83 : vector<8x8xf32>
    %cst_58 = arith.constant dense<0.000000e+00> : vector<8xf32>
    %85 = vector.multi_reduction <add>, %84, %cst_58 [1] : vector<8x8xf32> to vector<8xf32>
    %86 = vector.shape_cast %85 : vector<8xf32> to vector<8x1xf32>
    %87 = arith.truncf %84 : vector<8x8xf32> to vector<8x8xbf16>
    %cst_59 = arith.constant dense<0.000000e+00> : vector<8x8xf32>
    %88 = tpu.matmul %87, %78, %cst_59 {dimension_numbers = #tpu.dot_dimension_numbers<[1], [0], [0], [1], [0, 0, 1, 1], [], []>} : vector<8x8xbf16>, vector<8x8xbf16>, vector<8x8xf32> -> vector<8x8xf32>
    %89 = tpu.reciprocal %86 {approx = true} : vector<8x1xf32> -> vector<8x1xf32>
    %90 = vector.broadcast %89 : vector<8x1xf32> to vector<8x8xf32>
    %91 = arith.mulf %88, %90 : vector<8x8xf32>
    %92 = arith.truncf %91 : vector<8x8xf32> to vector<8x8xbf16>
    %c2_60 = arith.constant 2 : index
    %c0_61 = arith.constant 0 : index
    %c0_62 = arith.constant 0 : index
    %93 = vector.load %arg10[%c2_60, %c0_61, %c0_62] : memref<4x8x32xbf16, #tpu.memory_space<vmem>>, vector<1x8x32xbf16>
    %94 = vector.shape_cast %93 : vector<1x8x32xbf16> to vector<8x32xbf16>
    %cst_63 = arith.constant dense<0.000000e+00> : vector<8x32xf32>
    %95 = tpu.matmul %92, %94, %cst_63 {dimension_numbers = #tpu.dot_dimension_numbers<[1], [0], [0], [1], [0, 0, 1, 1], [], []>} : vector<8x8xbf16>, vector<8x32xbf16>, vector<8x32xf32> -> vector<8x32xf32>
    %96 = arith.addf %66, %95 : vector<8x32xf32>
    %c3 = arith.constant 3 : index
    %c0_64 = arith.constant 0 : index
    %c0_65 = arith.constant 0 : index
    %97 = vector.load %arg4[%c3, %c0_64, %c0_65] : memref<4x32x8xbf16, #tpu.memory_space<vmem>>, vector<1x32x8xbf16>
    %98 = vector.shape_cast %97 : vector<1x32x8xbf16> to vector<32x8xbf16>
    %cst_66 = arith.constant dense<0.000000e+00> : vector<8x8xf32>
    %99 = tpu.matmul %5, %98, %cst_66 {dimension_numbers = #tpu.dot_dimension_numbers<[1], [0], [0], [1], [0, 0, 1, 1], [], []>} : vector<8x32xbf16>, vector<32x8xbf16>, vector<8x8xf32> -> vector<8x8xf32>
    %c3_67 = arith.constant 3 : index
    %c0_68 = arith.constant 0 : index
    %c0_69 = arith.constant 0 : index
    %100 = vector.load %arg7[%c3_67, %c0_68, %c0_69] : memref<4x1x8xf32, #tpu.memory_space<vmem>>, vector<1x1x8xf32>
    %101 = vector.shape_cast %100 : vector<1x1x8xf32> to vector<1x8xf32>
    %102 = vector.broadcast %101 : vector<1x8xf32> to vector<8x8xf32>
    %103 = arith.addf %99, %102 : vector<8x8xf32>
    %104 = arith.truncf %103 : vector<8x8xf32> to vector<8x8xbf16>
    %c3_70 = arith.constant 3 : index
    %c0_71 = arith.constant 0 : index
    %c0_72 = arith.constant 0 : index
    %105 = vector.load %arg13[%c3_70, %c0_71, %c0_72] : memref<4x8x8xbf16, #tpu.memory_space<vmem>>, vector<1x8x8xbf16>
    %106 = vector.shape_cast %105 : vector<1x8x8xbf16> to vector<8x8xbf16>
    %c3_73 = arith.constant 3 : index
    %c0_74 = arith.constant 0 : index
    %c0_75 = arith.constant 0 : index
    %107 = vector.load %arg14[%c3_73, %c0_74, %c0_75] : memref<4x8x8xbf16, #tpu.memory_space<vmem>>, vector<1x8x8xbf16>
    %108 = vector.shape_cast %107 : vector<1x8x8xbf16> to vector<8x8xbf16>
    %cst_76 = arith.constant dense<0.000000e+00> : vector<8x8xf32>
    %109 = tpu.matmul %104, %106, %cst_76 {dimension_numbers = #tpu.dot_dimension_numbers<[1], [1], [0], [0], [0, 0, 1, 0], [], []>} : vector<8x8xbf16>, vector<8x8xbf16>, vector<8x8xf32> -> vector<8x8xf32>
    %cst_77 = arith.constant dense<0xFF800000> : vector<8xf32>
    %110 = vector.multi_reduction <maximumf>, %109, %cst_77 [1] : vector<8x8xf32> to vector<8xf32>
    %111 = vector.shape_cast %110 : vector<8xf32> to vector<8x1xf32>
    %112 = vector.broadcast %111 : vector<8x1xf32> to vector<8x8xf32>
    %113 = arith.subf %109, %112 : vector<8x8xf32>
    %114 = math.exp %113 : vector<8x8xf32>
    %cst_78 = arith.constant dense<0.000000e+00> : vector<8xf32>
    %115 = vector.multi_reduction <add>, %114, %cst_78 [1] : vector<8x8xf32> to vector<8xf32>
    %116 = vector.shape_cast %115 : vector<8xf32> to vector<8x1xf32>
    %117 = arith.truncf %114 : vector<8x8xf32> to vector<8x8xbf16>
    %cst_79 = arith.constant dense<0.000000e+00> : vector<8x8xf32>
    %118 = tpu.matmul %117, %108, %cst_79 {dimension_numbers = #tpu.dot_dimension_numbers<[1], [0], [0], [1], [0, 0, 1, 1], [], []>} : vector<8x8xbf16>, vector<8x8xbf16>, vector<8x8xf32> -> vector<8x8xf32>
    %119 = tpu.reciprocal %116 {approx = true} : vector<8x1xf32> -> vector<8x1xf32>
    %120 = vector.broadcast %119 : vector<8x1xf32> to vector<8x8xf32>
    %121 = arith.mulf %118, %120 : vector<8x8xf32>
    %122 = arith.truncf %121 : vector<8x8xf32> to vector<8x8xbf16>
    %c3_80 = arith.constant 3 : index
    %c0_81 = arith.constant 0 : index
    %c0_82 = arith.constant 0 : index
    %123 = vector.load %arg10[%c3_80, %c0_81, %c0_82] : memref<4x8x32xbf16, #tpu.memory_space<vmem>>, vector<1x8x32xbf16>
    %124 = vector.shape_cast %123 : vector<1x8x32xbf16> to vector<8x32xbf16>
    %cst_83 = arith.constant dense<0.000000e+00> : vector<8x32xf32>
    %125 = tpu.matmul %122, %124, %cst_83 {dimension_numbers = #tpu.dot_dimension_numbers<[1], [0], [0], [1], [0, 0, 1, 1], [], []>} : vector<8x8xbf16>, vector<8x32xbf16>, vector<8x32xf32> -> vector<8x32xf32>
    %126 = arith.addf %96, %125 : vector<8x32xf32>
    %c0_84 = arith.constant 0 : index
    %c0_85 = arith.constant 0 : index
    %127 = vector.load %arg11[%c0_84, %c0_85] : memref<1x32xf32, #tpu.memory_space<vmem>>, vector<1x32xf32>
    %128 = vector.broadcast %127 : vector<1x32xf32> to vector<8x32xf32>
    %129 = arith.addf %126, %128 : vector<8x32xf32>
    %c0_86 = arith.constant 0 : index
    %c0_87 = arith.constant 0 : index
    %c0_88 = arith.constant 0 : index
    %130 = vector.load %arg12[%c0_86, %c0_87, %c0_88] : memref<1x8x32xf32, #tpu.memory_space<vmem>>, vector<1x8x32xf32>
    %131 = vector.shape_cast %130 : vector<1x8x32xf32> to vector<8x32xf32>
    %132 = vector.shape_cast %129 : vector<8x32xf32> to vector<1x8x32xf32>
    tpu.vector_store %arg12[%c0_86, %c0_87, %c0_88], %132 {strides = array<i32>} : memref<1x8x32xf32, #tpu.memory_space<vmem>>, vector<1x8x32xf32>,
    return
  }
  func.func @transform_0(%arg0: i32, %arg1: i32) -> (i32, i32, i32) {
    %c0_i32 = arith.constant 0 : i32
    %c0_i32_0 = arith.constant 0 : i32
    return %arg0, %arg1, %c0_i32 : i32, i32, i32
  }
  func.func @transform_1(%arg0: i32, %arg1: i32) -> (i32, i32, i32) {
    %c0_i32 = arith.constant 0 : i32
    %c0_i32_0 = arith.constant 0 : i32
    %c0_i32_1 = arith.constant 0 : i32
    return %arg0, %c0_i32, %c0_i32_0 : i32, i32, i32
  }
  func.func @transform_2(%arg0: i32, %arg1: i32) -> (i32, i32, i32) {
    %c0_i32 = arith.constant 0 : i32
    %c0_i32_0 = arith.constant 0 : i32
    %c0_i32_1 = arith.constant 0 : i32
    %c0_i32_2 = arith.constant 0 : i32
    return %c0_i32, %c0_i32_0, %c0_i32_1 : i32, i32, i32
  }
  func.func @transform_3(%arg0: i32, %arg1: i32) -> (i32, i32, i32) {
    %c0_i32 = arith.constant 0 : i32
    %c0_i32_0 = arith.constant 0 : i32
    %c0_i32_1 = arith.constant 0 : i32
    %c0_i32_2 = arith.constant 0 : i32
    return %c0_i32, %c0_i32_0, %c0_i32_1 : i32, i32, i32
  }
  func.func @transform_4(%arg0: i32, %arg1: i32) -> (i32, i32, i32) {
    %c0_i32 = arith.constant 0 : i32
    %c0_i32_0 = arith.constant 0 : i32
    %c0_i32_1 = arith.constant 0 : i32
    %c0_i32_2 = arith.constant 0 : i32
    return %c0_i32, %c0_i32_0, %c0_i32_1 : i32, i32, i32
  }
  func.func @transform_5(%arg0: i32, %arg1: i32) -> (i32, i32, i32) {
    %c0_i32 = arith.constant 0 : i32
    %c0_i32_0 = arith.constant 0 : i32
    %c0_i32_1 = arith.constant 0 : i32
    %c0_i32_2 = arith.constant 0 : i32
    return %c0_i32, %c0_i32_0, %c0_i32_1 : i32, i32, i32
  }
  func.func @transform_6(%arg0: i32, %arg1: i32) -> (i32, i32, i32) {
    %c0_i32 = arith.constant 0 : i32
    %c0_i32_0 = arith.constant 0 : i32
    %c0_i32_1 = arith.constant 0 : i32
    %c0_i32_2 = arith.constant 0 : i32
    return %c0_i32, %c0_i32_0, %c0_i32_1 : i32, i32, i32
  }
  func.func @transform_7(%arg0: i32, %arg1: i32) -> (i32, i32, i32) {
    %c0_i32 = arith.constant 0 : i32
    %c0_i32_0 = arith.constant 0 : i32
    %c0_i32_1 = arith.constant 0 : i32
    %c0_i32_2 = arith.constant 0 : i32
    return %c0_i32, %c0_i32_0, %c0_i32_1 : i32, i32, i32
  }
  func.func @transform_8(%arg0: i32, %arg1: i32) -> (i32, i32, i32) {
    %c0_i32 = arith.constant 0 : i32
    %c0_i32_0 = arith.constant 0 : i32
    %c0_i32_1 = arith.constant 0 : i32
    %c0_i32_2 = arith.constant 0 : i32
    return %c0_i32, %c0_i32_0, %c0_i32_1 : i32, i32, i32
  }
  func.func @transform_9(%arg0: i32, %arg1: i32) -> (i32, i32) {
    %c0_i32 = arith.constant 0 : i32
    %c0_i32_0 = arith.constant 0 : i32
    %c0_i32_1 = arith.constant 0 : i32
    return %c0_i32, %c0_i32_0 : i32, i32
  }
  func.func @transform_10(%arg0: i32, %arg1: i32) -> (i32, i32, i32) {
    %c0_i32 = arith.constant 0 : i32
    %c0_i32_0 = arith.constant 0 : i32
    return %arg0, %arg1, %c0_i32 : i32, i32, i32
  }
}

</mosaic_0001>

<llo_original>
// kernel: tpu_custom_call.1
$region0: #{tpu_custom_call.1}
  #allocation0 [shape = 'u32[]', space=smem, size = 0x4, offset = 0x4, fixed_abs, tag = 'smem constant byte address 0x4 - core index']
  #allocation1 [shape = 'u32[72,128]{1,0:T(1,128)}', space=vmem, size = 0x9000, scoped, tag = 'internal scratch']
  #allocation2 [shape = 'bf16[4,8,8]{2,1,0:T(8,128)(2,1)}', space=vmem, size = 0x2000, scoped, tag = 'scratch operand']
  #allocation3 [shape = 'bf16[4,8,8]{2,1,0:T(8,128)(2,1)}', space=vmem, size = 0x2000, scoped, tag = 'scratch operand']
  %s0 = inlined_call_operand.vmem [shape: f32[2,8,32], index: 0, kind: input, shape index: {}]
  %s1 = inlined_call_operand.vmem [shape: f32[2,8,32], index: 1, kind: input, shape index: {}]
  %s2 = inlined_call_operand.vmem [shape: bf16[4,32,8], index: 2, kind: input, shape index: {}]
  %s3 = inlined_call_operand.vmem [shape: bf16[4,32,8], index: 3, kind: input, shape index: {}]
  %s4 = inlined_call_operand.vmem [shape: bf16[4,32,8], index: 4, kind: input, shape index: {}]
  %s5 = inlined_call_operand.vmem [shape: f32[4,1,8], index: 5, kind: input, shape index: {}]
  %s6 = inlined_call_operand.vmem [shape: f32[4,1,8], index: 6, kind: input, shape index: {}]
  %s7 = inlined_call_operand.vmem [shape: f32[4,1,8], index: 7, kind: input, shape index: {}]
  %s8 = inlined_call_operand.vmem [shape: bf16[4,8,32], index: 8, kind: input, shape index: {}]
  %s9 = inlined_call_operand.vmem [shape: f32[1,32], index: 9, kind: input, shape index: {}]
  %s10 = inlined_call_operand.hbm [shape: f32[2,8,32], index: 10, kind: output, shape index: {}]
  %s11 = sld [smem:[#allocation0]]
  $region77: #{tpu_custom_call.1} parent=0
    _
  %s13 = ssub.s32 1, %s11
  %s14 = scalar_select 0, %s13, %s11
  $region1: #{tpu_custom_call.1} parent=0
    #allocation4 [shape = 'u8[8192]{0}', space=vmem, size = 0x2000, scoped, tag = 'output window, operand 0']
    #allocation5 [shape = 's32[2]{0}', space=sflag, size = 0x8, scoped, tag = 'scoped memory for tpu_custom_call.1']
    %15 = vsyncpa [#allocation5], 0
    %s16 = scalar_lea.sflag [#allocation5], 1
    %17 = vsyncpa %s16, 0
    loop: start=0, step=1, limit=4
    $region2: #{tpu_custom_call.1} parent=1 // loop_pre_header
      _
    $region3: #{tpu_custom_call.1} parent=1 // loop_header
      %s19 = sphi 0, %s23
      %p20 = scmp.ge.s32.totalorder %s19, 4
      %s26 = sphi 0, %s38
      %s27 = sphi 0, %s34
      %s28 = sphi 0, %s26
      %s29 = sphi 0, %s27
      %s30 = sphi 0, %s28
      %s31 = sphi 0, %s29
      %s43 = sphi 0, %s45
      %s46 = sphi 0, %s43
      %s47 = sphi 0, %s46
      %s63 = sphi 0, %s47
      %s69 = sphi 0, %s71
      %s72 = sphi 0, %s69
      %s73 = sphi 0, %s72
      %s89 = sphi 0, %s73
      %s93 = sphi 0, %s93
      %s95 = sphi 0, %s93
      %s96 = sphi 0, %s95
      %s110 = sphi 0, %s96
      %s114 = sphi 0, %s114
      %s116 = sphi 0, %s114
      %s117 = sphi 0, %s116
      %s131 = sphi 0, %s117
      %s135 = sphi 0, %s135
      %s137 = sphi 0, %s135
      %s138 = sphi 0, %s137
      %s152 = sphi 0, %s138
      %s156 = sphi 0, %s156
      %s158 = sphi 0, %s156
      %s159 = sphi 0, %s158
      %s173 = sphi 0, %s159
      %s177 = sphi 0, %s177
      %s179 = sphi 0, %s177
      %s180 = sphi 0, %s179
      %s194 = sphi 0, %s180
      %s198 = sphi 0, %s198
      %s200 = sphi 0, %s198
      %s201 = sphi 0, %s200
      %s215 = sphi 0, %s201
      %s219 = sphi 0, %s219
      %s221 = sphi 0, %s219
      %s222 = sphi 0, %s221
      %s236 = sphi 0, %s222
      %s240 = sphi 0, %s240
      %s242 = sphi 0, %s240
      %s243 = sphi 0, %s242
      %s257 = sphi 0, %s243
      %s265 = sphi 0, %s267
      %s268 = sphi 0, %s265
      %s269 = sphi 0, %s268
      %s285 = sphi 0, %s269
    $region4: #{tpu_custom_call.1} parent=1 // loop_header_branch
      %22 = sbr.rel (%p20) target = $region8
    $region5: #{tpu_custom_call.1} parent=1 // loop_body
      %s24 = ssub.s32 %s19, 1
      %s25 = ssub.s32 %s19, 2
      %s32 = sadd.s32 1, %s27
      %p33 = scmp.ge.s32.totalorder %s32, 1
      %s34 = scalar_select %p33, 0, %s32
      %s35 = sadd.s32 1, %s26
      %s36 = scalar_select %p33, %s35, %s26
      %p37 = scmp.ge.s32.totalorder %s36, 2
      %s38 = scalar_select %p37, 0, %s36
      %s39 = ssub.s32 %s26, %s38
      %s40 = ssub.s32 %s27, %s34
      %s41 = sor.u32 %s39, %s40
      %p42 = scmp.eq.s32.totalorder %s41, 0
      %s44 = sadd.s32 %s43, 1
      %s45 = scalar_select %p42, %s43, %s44
      %p48 = pneg %p42
      %p49 = scmp.eq.s32.totalorder %s19, 1
      %p50 = por %p48, %p49
      %p51 = scmp.ne.s32.totalorder %s43, %s46
      %p52 = scmp.eq.s32.totalorder %s19, 0
      %p53 = por %p51, %p52
      %p54 = scmp.ne.s32.totalorder %s43, %s46
      %p55 = scmp.eq.s32.totalorder %s24, 1
      %p56 = por %p54, %p55
      %p57 = scmp.ne.s32.totalorder %s46, %s47
      %p58 = scmp.eq.s32.totalorder %s24, 0
      %p59 = por %p57, %p58
      %p60 = scmp.ne.s32.totalorder %s46, %s47
      %p61 = scmp.eq.s32.totalorder %s25, 1
      %p62 = por %p60, %p61
      %p64 = scmp.ne.s32.totalorder %s47, %s63
      %p65 = scmp.eq.s32.totalorder %s25, 0
      %p66 = por %p64, %p65
      %s67 = ssub.s32 %s26, %s38
      %p68 = scmp.eq.s32.totalorder %s67, 0
      %s70 = sadd.s32 %s69, 1
      %s71 = scalar_select %p68, %s69, %s70
      %p74 = pneg %p68
      %p75 = scmp.eq.s32.totalorder %s19, 1
      %p76 = por %p74, %p75
      %p77 = scmp.ne.s32.totalorder %s69, %s72
      %p78 = scmp.eq.s32.totalorder %s19, 0
      %p79 = por %p77, %p78
      %p80 = scmp.ne.s32.totalorder %s69, %s72
      %p81 = scmp.eq.s32.totalorder %s24, 1
      %p82 = por %p80, %p81
      %p83 = scmp.ne.s32.totalorder %s72, %s73
      %p84 = scmp.eq.s32.totalorder %s24, 0
      %p85 = por %p83, %p84
      %p86 = scmp.ne.s32.totalorder %s72, %s73
      %p87 = scmp.eq.s32.totalorder %s25, 1
      %p88 = por %p86, %p87
      %p90 = scmp.ne.s32.totalorder %s73, %s89
      %p91 = scmp.eq.s32.totalorder %s25, 0
      %p92 = por %p90, %p91
      %s94 = sadd.s32 %s93, 1
      %p97 = scmp.eq.s32.totalorder %s19, 1
      %p98 = scmp.ne.s32.totalorder %s93, %s95
      %p99 = scmp.eq.s32.totalorder %s19, 0
      %p100 = por %p98, %p99
      %p101 = scmp.ne.s32.totalorder %s93, %s95
      %p102 = scmp.eq.s32.totalorder %s24, 1
      %p103 = por %p101, %p102
      %p104 = scmp.ne.s32.totalorder %s95, %s96
      %p105 = scmp.eq.s32.totalorder %s24, 0
      %p106 = por %p104, %p105
      %p107 = scmp.ne.s32.totalorder %s95, %s96
      %p108 = scmp.eq.s32.totalorder %s25, 1
      %p109 = por %p107, %p108
      %p111 = scmp.ne.s32.totalorder %s96, %s110
      %p112 = scmp.eq.s32.totalorder %s25, 0
      %p113 = por %p111, %p112
      %s115 = sadd.s32 %s114, 1
      %p118 = scmp.eq.s32.totalorder %s19, 1
      %p119 = scmp.ne.s32.totalorder %s114, %s116
      %p120 = scmp.eq.s32.totalorder %s19, 0
      %p121 = por %p119, %p120
      %p122 = scmp.ne.s32.totalorder %s114, %s116
      %p123 = scmp.eq.s32.totalorder %s24, 1
      %p124 = por %p122, %p123
      %p125 = scmp.ne.s32.totalorder %s116, %s117
      %p126 = scmp.eq.s32.totalorder %s24, 0
      %p127 = por %p125, %p126
      %p128 = scmp.ne.s32.totalorder %s116, %s117
      %p129 = scmp.eq.s32.totalorder %s25, 1
      %p130 = por %p128, %p129
      %p132 = scmp.ne.s32.totalorder %s117, %s131
      %p133 = scmp.eq.s32.totalorder %s25, 0
      %p134 = por %p132, %p133
      %s136 = sadd.s32 %s135, 1
      %p139 = scmp.eq.s32.totalorder %s19, 1
      %p140 = scmp.ne.s32.totalorder %s135, %s137
      %p141 = scmp.eq.s32.totalorder %s19, 0
      %p142 = por %p140, %p141
      %p143 = scmp.ne.s32.totalorder %s135, %s137
      %p144 = scmp.eq.s32.totalorder %s24, 1
      %p145 = por %p143, %p144
      %p146 = scmp.ne.s32.totalorder %s137, %s138
      %p147 = scmp.eq.s32.totalorder %s24, 0
      %p148 = por %p146, %p147
      %p149 = scmp.ne.s32.totalorder %s137, %s138
      %p150 = scmp.eq.s32.totalorder %s25, 1
      %p151 = por %p149, %p150
      %p153 = scmp.ne.s32.totalorder %s138, %s152
      %p154 = scmp.eq.s32.totalorder %s25, 0
      %p155 = por %p153, %p154
      %s157 = sadd.s32 %s156, 1
      %p160 = scmp.eq.s32.totalorder %s19, 1
      %p161 = scmp.ne.s32.totalorder %s156, %s158
      %p162 = scmp.eq.s32.totalorder %s19, 0
      %p163 = por %p161, %p162
      %p164 = scmp.ne.s32.totalorder %s156, %s158
      %p165 = scmp.eq.s32.totalorder %s24, 1
      %p166 = por %p164, %p165
      %p167 = scmp.ne.s32.totalorder %s158, %s159
      %p168 = scmp.eq.s32.totalorder %s24, 0
      %p169 = por %p167, %p168
      %p170 = scmp.ne.s32.totalorder %s158, %s159
      %p171 = scmp.eq.s32.totalorder %s25, 1
      %p172 = por %p170, %p171
      %p174 = scmp.ne.s32.totalorder %s159, %s173
      %p175 = scmp.eq.s32.totalorder %s25, 0
      %p176 = por %p174, %p175
      %s178 = sadd.s32 %s177, 1
      %p181 = scmp.eq.s32.totalorder %s19, 1
      %p182 = scmp.ne.s32.totalorder %s177, %s179
      %p183 = scmp.eq.s32.totalorder %s19, 0
      %p184 = por %p182, %p183
      %p185 = scmp.ne.s32.totalorder %s177, %s179
      %p186 = scmp.eq.s32.totalorder %s24, 1
      %p187 = por %p185, %p186
      %p188 = scmp.ne.s32.totalorder %s179, %s180
      %p189 = scmp.eq.s32.totalorder %s24, 0
      %p190 = por %p188, %p189
      %p191 = scmp.ne.s32.totalorder %s179, %s180
      %p192 = scmp.eq.s32.totalorder %s25, 1
      %p193 = por %p191, %p192
      %p195 = scmp.ne.s32.totalorder %s180, %s194
      %p196 = scmp.eq.s32.totalorder %s25, 0
      %p197 = por %p195, %p196
      %s199 = sadd.s32 %s198, 1
      %p202 = scmp.eq.s32.totalorder %s19, 1
      %p203 = scmp.ne.s32.totalorder %s198, %s200
      %p204 = scmp.eq.s32.totalorder %s19, 0
      %p205 = por %p203, %p204
      %p206 = scmp.ne.s32.totalorder %s198, %s200
      %p207 = scmp.eq.s32.totalorder %s24, 1
      %p208 = por %p206, %p207
      %p209 = scmp.ne.s32.totalorder %s200, %s201
      %p210 = scmp.eq.s32.totalorder %s24, 0
      %p211 = por %p209, %p210
      %p212 = scmp.ne.s32.totalorder %s200, %s201
      %p213 = scmp.eq.s32.totalorder %s25, 1
      %p214 = por %p212, %p213
      %p216 = scmp.ne.s32.totalorder %s201, %s215
      %p217 = scmp.eq.s32.totalorder %s25, 0
      %p218 = por %p216, %p217
      %s220 = sadd.s32 %s219, 1
      %p223 = scmp.eq.s32.totalorder %s19, 1
      %p224 = scmp.ne.s32.totalorder %s219, %s221
      %p225 = scmp.eq.s32.totalorder %s19, 0
      %p226 = por %p224, %p225
      %p227 = scmp.ne.s32.totalorder %s219, %s221
      %p228 = scmp.eq.s32.totalorder %s24, 1
      %p229 = por %p227, %p228
      %p230 = scmp.ne.s32.totalorder %s221, %s222
      %p231 = scmp.eq.s32.totalorder %s24, 0
      %p232 = por %p230, %p231
      %p233 = scmp.ne.s32.totalorder %s221, %s222
      %p234 = scmp.eq.s32.totalorder %s25, 1
      %p235 = por %p233, %p234
      %p237 = scmp.ne.s32.totalorder %s222, %s236
      %p238 = scmp.eq.s32.totalorder %s25, 0
      %p239 = por %p237, %p238
      %s241 = sadd.s32 %s240, 1
      %p244 = scmp.eq.s32.totalorder %s19, 1
      %p245 = scmp.ne.s32.totalorder %s240, %s242
      %p246 = scmp.eq.s32.totalorder %s19, 0
      %p247 = por %p245, %p246
      %p248 = scmp.ne.s32.totalorder %s240, %s242
      %p249 = scmp.eq.s32.totalorder %s24, 1
      %p250 = por %p248, %p249
      %p251 = scmp.ne.s32.totalorder %s242, %s243
      %p252 = scmp.eq.s32.totalorder %s24, 0
      %p253 = por %p251, %p252
      %p254 = scmp.ne.s32.totalorder %s242, %s243
      %p255 = scmp.eq.s32.totalorder %s25, 1
      %p256 = por %p254, %p255
      %p258 = scmp.ne.s32.totalorder %s243, %s257
      %p259 = scmp.eq.s32.totalorder %s25, 0
      %p260 = por %p258, %p259
      %s261 = ssub.s32 %s26, %s38
      %s262 = ssub.s32 %s27, %s34
      %s263 = sor.u32 %s261, %s262
      %p264 = scmp.eq.s32.totalorder %s263, 0
      %s266 = sadd.s32 %s265, 1
      %s267 = scalar_select %p264, %s265, %s266
      %p270 = pneg %p264
      %p271 = scmp.eq.s32.totalorder %s19, 1
      %p272 = por %p270, %p271
      %p273 = scmp.ne.s32.totalorder %s265, %s268
      %p274 = scmp.eq.s32.totalorder %s19, 0
      %p275 = por %p273, %p274
      %p276 = scmp.ne.s32.totalorder %s265, %s268
      %p277 = scmp.eq.s32.totalorder %s24, 1
      %p278 = por %p276, %p277
      %p279 = scmp.ne.s32.totalorder %s268, %s269
      %p280 = scmp.eq.s32.totalorder %s24, 0
      %p281 = por %p279, %p280
      %p282 = scmp.ne.s32.totalorder %s268, %s269
      %p283 = scmp.eq.s32.totalorder %s25, 1
      %p284 = por %p282, %p283
      %p286 = scmp.ne.s32.totalorder %s269, %s285
      %p287 = scmp.eq.s32.totalorder %s25, 0
      %p288 = por %p286, %p287
      %p289 = scmp.le.s32.totalorder 1, %s19
      %p290 = scmp.lt.s32.totalorder %s19, 3
      %p291 = pnand %p289, %p290
      %p292 = pneg %p291
      // Predicated region
      $region9: #{tpu_custom_call.1} parent=5 // pred_check
        _
      $region10: #{tpu_custom_call.1} parent=5 // pred_check_branch
        %294 = sbr.rel (%p291) target = $region12
      $region11: #{tpu_custom_call.1} parent=5 // pred_region
        %s295 = ssub.s32 %s19, 1
        // Predicated region
        $region13: #{tpu_custom_call.1} parent=11 // pred_check
          %p296 = pneg %p106
        $region14: #{tpu_custom_call.1} parent=11 // pred_check_branch
          %298 = sbr.rel (%p296) target = $region16
        $region15: #{tpu_custom_call.1} parent=11 // pred_region
          _
        $region16: #{tpu_custom_call.1} parent=11 // pred_fallthru
          _
        // Predicated region
        $region17: #{tpu_custom_call.1} parent=11 // pred_check
          %p299 = pneg %p127
        $region18: #{tpu_custom_call.1} parent=11 // pred_check_branch
          %301 = sbr.rel (%p299) target = $region20
        $region19: #{tpu_custom_call.1} parent=11 // pred_region
          _
        $region20: #{tpu_custom_call.1} parent=11 // pred_fallthru
          _
        // Predicated region
        $region21: #{tpu_custom_call.1} parent=11 // pred_check
          %p302 = pneg %p148
        $region22: #{tpu_custom_call.1} parent=11 // pred_check_branch
          %304 = sbr.rel (%p302) target = $region24
        $region23: #{tpu_custom_call.1} parent=11 // pred_region
          _
        $region24: #{tpu_custom_call.1} parent=11 // pred_fallthru
          _
        // Predicated region
        $region25: #{tpu_custom_call.1} parent=11 // pred_check
          %p305 = pneg %p169
        $region26: #{tpu_custom_call.1} parent=11 // pred_check_branch
          %307 = sbr.rel (%p305) target = $region28
        $region27: #{tpu_custom_call.1} parent=11 // pred_region
          _
        $region28: #{tpu_custom_call.1} parent=11 // pred_fallthru
          _
        // Predicated region
        $region29: #{tpu_custom_call.1} parent=11 // pred_check
          %p308 = pneg %p190
        $region30: #{tpu_custom_call.1} parent=11 // pred_check_branch
          %310 = sbr.rel (%p308) target = $region32
        $region31: #{tpu_custom_call.1} parent=11 // pred_region
          _
        $region32: #{tpu_custom_call.1} parent=11 // pred_fallthru
          _
        // Predicated region
        $region33: #{tpu_custom_call.1} parent=11 // pred_check
          %p311 = pneg %p211
        $region34: #{tpu_custom_call.1} parent=11 // pred_check_branch
          %313 = sbr.rel (%p311) target = $region36
        $region35: #{tpu_custom_call.1} parent=11 // pred_region
          _
        $region36: #{tpu_custom_call.1} parent=11 // pred_fallthru
          _
        // Predicated region
        $region37: #{tpu_custom_call.1} parent=11 // pred_check
          %p314 = pneg %p232
        $region38: #{tpu_custom_call.1} parent=11 // pred_check_branch
          %316 = sbr.rel (%p314) target = $region40
        $region39: #{tpu_custom_call.1} parent=11 // pred_region
          _
        $region40: #{tpu_custom_call.1} parent=11 // pred_fallthru
          _
        // Predicated region
        $region41: #{tpu_custom_call.1} parent=11 // pred_check
          %p317 = pneg %p253
        $region42: #{tpu_custom_call.1} parent=11 // pred_check_branch
          %319 = sbr.rel (%p317) target = $region44
        $region43: #{tpu_custom_call.1} parent=11 // pred_region
          _
        $region44: #{tpu_custom_call.1} parent=11 // pred_fallthru
          _
      $region12: #{tpu_custom_call.1} parent=5 // pred_fallthru
        _
      %p320 = scmp.lt.s32.totalorder %s19, 2
      // Predicated region
      $region45: #{tpu_custom_call.1} parent=5 // pred_check
        %p321 = pneg %p320
      $region46: #{tpu_custom_call.1} parent=5 // pred_check_branch
        %323 = sbr.rel (%p321) target = $region48
      $region47: #{tpu_custom_call.1} parent=5 // pred_region
        // Predicated region
        $region49: #{tpu_custom_call.1} parent=47 // pred_check
          %p324 = pneg %p53
        $region50: #{tpu_custom_call.1} parent=47 // pred_check_branch
          %326 = sbr.rel (%p324) target = $region52
        $region51: #{tpu_custom_call.1} parent=47 // pred_region
          %p327 = scmp.lt.s32.totalorder %s26, 1
          %s328 = scalar_select %p327, %s26, 1
          %p329 = scmp.lt.s32.totalorder %s27, 0
          %s330 = scalar_select %p329, %s27, 0
          %s331 = sadd.s32 %s330, %s328
          %s332 = smul.addr %s331, 8
          %s333 = scalar_lea.vmem %s0, %s332
        $region52: #{tpu_custom_call.1} parent=47 // pred_fallthru
          _
        // Predicated region
        $region53: #{tpu_custom_call.1} parent=47 // pred_check
          %p334 = pneg %p79
        $region54: #{tpu_custom_call.1} parent=47 // pred_check_branch
          %336 = sbr.rel (%p334) target = $region56
        $region55: #{tpu_custom_call.1} parent=47 // pred_region
          %p337 = scmp.lt.s32.totalorder %s26, 1
          %s338 = scalar_select %p337, %s26, 1
          %s339 = smul.addr %s338, 8
          %s340 = scalar_lea.vmem %s1, %s339
        $region56: #{tpu_custom_call.1} parent=47 // pred_fallthru
          _
      $region48: #{tpu_custom_call.1} parent=5 // pred_fallthru
        _
      %p341 = scmp.le.s32.totalorder 1, %s19
      %p342 = scmp.lt.s32.totalorder %s19, 3
      %p343 = pnand %p341, %p342
      %p344 = pneg %p343
      // Predicated region
      $region57: #{tpu_custom_call.1} parent=5 // pred_check
        _
      $region58: #{tpu_custom_call.1} parent=5 // pred_check_branch
        %346 = sbr.rel (%p343) target = $region60
      $region59: #{tpu_custom_call.1} parent=5 // pred_region
        %s347 = ssub.s32 %s19, 1
        %p348 = scmp.lt.s32.totalorder %s28, 1
        %s349 = scalar_select %p348, %s28, 1
        %p350 = scmp.lt.s32.totalorder %s29, 0
        %s351 = scalar_select %p350, %s29, 0
        %s352 = sadd.s32 %s351, %s349
        %s353 = smul.addr %s352, 8
        %s354 = scalar_lea.vmem %s0, %s353
        %p355 = pneg %p59
        %p356 = pneg %p56
        %p357 = scmp.lt.s32.totalorder %s28, 1
        %s358 = scalar_select %p357, %s28, 1
        %s359 = smul.addr %s358, 8
        %s360 = scalar_lea.vmem %s1, %s359
        %p361 = pneg %p85
        %p362 = pneg %p82
        %p363 = pneg %p106
        %p364 = pneg %p103
        %p365 = pneg %p127
        %p366 = pneg %p124
        %p367 = pneg %p148
        %p368 = pneg %p145
        %p369 = pneg %p169
        %p370 = pneg %p166
        %p371 = pneg %p190
        %p372 = pneg %p187
        %p373 = pneg %p211
        %p374 = pneg %p208
        %p375 = pneg %p232
        %p376 = pneg %p229
        %p377 = pneg %p253
        %p378 = pneg %p250
        %p379 = pneg %p281
        %p380 = pneg %p278
        %s381 = sand.u32 %s268, 1
        %s382 = scalar_lea.sflag [#allocation5], %s381
        %s383 = sand.u32 %s268, 1
        %s384 = smul.addr %s383, 8
        %s385 = scalar_lea.vmem [#allocation4], %s384
        %p386 = scmp.lt.s32.totalorder %s28, 1
        %s387 = scalar_select %p386, %s28, 1
        %p388 = scmp.lt.s32.totalorder %s29, 0
        %s389 = scalar_select %p388, %s29, 0
        %s390 = sadd.s32 %s389, %s387
        %s391 = smul.addr %s390, 8
        %s392 = scalar_lea.vmem %s0, %s391
        %p393 = scmp.lt.s32.totalorder %s28, 1
        %s394 = scalar_select %p393, %s28, 1
        %s395 = smul.addr %s394, 8
        %s396 = scalar_lea.vmem %s1, %s395
        %p398 = scmp.eq.s32.totalorder %s29, 0
        // Predicated region
        $region61: #{tpu_custom_call.1} parent=59 // pred_check
          %p399 = pneg %p398
        $region62: #{tpu_custom_call.1} parent=59 // pred_check_branch
          %401 = sbr.rel (%p399) target = $region64
        $region63: #{tpu_custom_call.1} parent=59 // pred_region
          %v402 = vld [vmem:[%s396] sm:$0xff]
          %v403 = vpack.c.bf16 %v402, %v402
          %v404 = vld [vmem:[%s3] sm:$0xf]
          %v405 = vld [vmem:[%s3 + $0x4] sm:$0xf]
          %v406 = vld [vmem:[%s3 + $0x8] sm:$0xf]
          %v407 = vld [vmem:[%s3 + $0xc] sm:$0xf]
          %v408 = vld [vmem:[%s6] sm:$0x1]
          %v410 = vperm.slane %v408, 0
          %v416 = vunpack.c.l.b16 %v404
          %v417 = vunpack.c.l.b16 %v405
          %v418 = vunpack.c.l.b16 %v406
          %v419 = vunpack.c.l.b16 %v407
          %v420 = vpack.c.b16 %v417, %v416
          %v421 = vpack.c.b16 %v419, %v418
          %vm424 = vcmask 261120
          %v426 = vsel %vm424, %v403, 0
          %428 = vmatpush.bf16.msra.mxu0 0
          %429 = vmatpush.bf16.msra.mxu0 0
          %430 = vmatpush.bf16.msra.mxu0 0
          %431 = vmatpush.bf16.msra.mxu0 0
          %432 = vmatpush.bf16.msra.mxu0 0
          %433 = vmatpush.bf16.msra.mxu0 0
          %434 = vmatpush.bf16.msra.mxu0 %v421
          %435 = vmatpush.bf16.msra.mxu0 %v420
          %436 = vmatmul.bf16.gmra.mxu0 %v426
          %v437 = vpop.f32.mrf.mxu0
          %v438 = vadd.f32 %v410, %v437
          %v439 = vpop.f32.mrf.mxu0
          %440 = vdwg.mxu0
          %v441 = vld [vmem:[%s4] sm:$0xf]
          %v442 = vld [vmem:[%s4 + $0x4] sm:$0xf]
          %v443 = vld [vmem:[%s4 + $0x8] sm:$0xf]
          %v444 = vld [vmem:[%s4 + $0xc] sm:$0xf]
          %v445 = vld [vmem:[%s7] sm:$0x1]
          %v447 = vperm.slane %v445, 0
          %v453 = vunpack.c.l.b16 %v441
          %v454 = vunpack.c.l.b16 %v442
          %v455 = vunpack.c.l.b16 %v443
          %v456 = vunpack.c.l.b16 %v444
          %v457 = vpack.c.b16 %v454, %v453
          %v458 = vpack.c.b16 %v456, %v455
          %461 = vmatpush.bf16.msra.mxu0 0
          %462 = vmatpush.bf16.msra.mxu0 0
          %463 = vmatpush.bf16.msra.mxu0 0
          %464 = vmatpush.bf16.msra.mxu0 0
          %465 = vmatpush.bf16.msra.mxu0 0
          %466 = vmatpush.bf16.msra.mxu0 0
          %467 = vmatpush.bf16.msra.mxu0 %v458
          %468 = vmatpush.bf16.msra.mxu0 %v457
          %469 = vmatmul.bf16.gmra.mxu0 %v426
          %v470 = vpop.f32.mrf.mxu0
          %v471 = vadd.f32 %v447, %v470
          %v472 = vpop.f32.mrf.mxu0
          %473 = vdwg.mxu0
          %v474 = vpack.c.bf16 %v438, %v438
          %vm475 = vcmask 60416
          %476 = vst.msk [vmem:[#allocation2] sm:$0xf] %vm475, %v474
          %v477 = vpack.c.bf16 %v471, %v471
          %478 = vst.msk [vmem:[#allocation3] sm:$0xf] %vm475, %v477
          %s479 = scalar_lea.vmem %s3, 16
          %v480 = vld [vmem:[%s479] sm:$0xf]
          %v481 = vld [vmem:[%s479 + $0x4] sm:$0xf]
          %v482 = vld [vmem:[%s479 + $0x8] sm:$0xf]
          %v483 = vld [vmem:[%s479 + $0xc] sm:$0xf]
          %s484 = scalar_lea.vmem %s6, 1
          %v485 = vld [vmem:[%s484] sm:$0x1]
          %v487 = vperm.slane %v485, 0
          %v493 = vunpack.c.l.b16 %v480
          %v494 = vunpack.c.l.b16 %v481
          %v495 = vunpack.c.l.b16 %v482
          %v496 = vunpack.c.l.b16 %v483
          %v497 = vpack.c.b16 %v494, %v493
          %v498 = vpack.c.b16 %v496, %v495
          %501 = vmatpush.bf16.msra.mxu0 0
          %502 = vmatpush.bf16.msra.mxu0 0
          %503 = vmatpush.bf16.msra.mxu0 0
          %504 = vmatpush.bf16.msra.mxu0 0
          %505 = vmatpush.bf16.msra.mxu0 0
          %506 = vmatpush.bf16.msra.mxu0 0
          %507 = vmatpush.bf16.msra.mxu0 %v498
          %508 = vmatpush.bf16.msra.mxu0 %v497
          %509 = vmatmul.bf16.gmra.mxu0 %v426
          %v510 = vpop.f32.mrf.mxu0
          %v511 = vadd.f32 %v487, %v510
          %v512 = vpop.f32.mrf.mxu0
          %513 = vdwg.mxu0
          %s514 = scalar_lea.vmem %s4, 16
          %v515 = vld [vmem:[%s514] sm:$0xf]
          %v516 = vld [vmem:[%s514 + $0x4] sm:$0xf]
          %v517 = vld [vmem:[%s514 + $0x8] sm:$0xf]
          %v518 = vld [vmem:[%s514 + $0xc] sm:$0xf]
          %s519 = scalar_lea.vmem %s7, 1
          %v520 = vld [vmem:[%s519] sm:$0x1]
          %v522 = vperm.slane %v520, 0
          %v528 = vunpack.c.l.b16 %v515
          %v529 = vunpack.c.l.b16 %v516
          %v530 = vunpack.c.l.b16 %v517
          %v531 = vunpack.c.l.b16 %v518
          %v532 = vpack.c.b16 %v529, %v528
          %v533 = vpack.c.b16 %v531, %v530
          %536 = vmatpush.bf16.msra.mxu0 0
          %537 = vmatpush.bf16.msra.mxu0 0
          %538 = vmatpush.bf16.msra.mxu0 0
          %539 = vmatpush.bf16.msra.mxu0 0
          %540 = vmatpush.bf16.msra.mxu0 0
          %541 = vmatpush.bf16.msra.mxu0 0
          %542 = vmatpush.bf16.msra.mxu0 %v533
          %543 = vmatpush.bf16.msra.mxu0 %v532
          %544 = vmatmul.bf16.gmra.mxu0 %v426
          %v545 = vpop.f32.mrf.mxu0
          %v546 = vadd.f32 %v522, %v545
          %v547 = vpop.f32.mrf.mxu0
          %548 = vdwg.mxu0
          %v549 = vpack.c.bf16 %v511, %v511
          %s550 = scalar_lea.vmem [#allocation2], 4
          %551 = vst.msk [vmem:[%s550] sm:$0xf] %vm475, %v549
          %v552 = vpack.c.bf16 %v546, %v546
          %s553 = scalar_lea.vmem [#allocation3], 4
          %554 = vst.msk [vmem:[%s553] sm:$0xf] %vm475, %v552
          %s555 = scalar_lea.vmem %s3, 32
          %v556 = vld [vmem:[%s555] sm:$0xf]
          %v557 = vld [vmem:[%s555 + $0x4] sm:$0xf]
          %v558 = vld [vmem:[%s555 + $0x8] sm:$0xf]
          %v559 = vld [vmem:[%s555 + $0xc] sm:$0xf]
          %s560 = scalar_lea.vmem %s6, 2
          %v561 = vld [vmem:[%s560] sm:$0x1]
          %v563 = vperm.slane %v561, 0
          %v569 = vunpack.c.l.b16 %v556
          %v570 = vunpack.c.l.b16 %v557
          %v571 = vunpack.c.l.b16 %v558
          %v572 = vunpack.c.l.b16 %v559
          %v573 = vpack.c.b16 %v570, %v569
          %v574 = vpack.c.b16 %v572, %v571
          %577 = vmatpush.bf16.msra.mxu0 0
          %578 = vmatpush.bf16.msra.mxu0 0
          %579 = vmatpush.bf16.msra.mxu0 0
          %580 = vmatpush.bf16.msra.mxu0 0
          %581 = vmatpush.bf16.msra.mxu0 0
          %582 = vmatpush.bf16.msra.mxu0 0
          %583 = vmatpush.bf16.msra.mxu0 %v574
          %584 = vmatpush.bf16.msra.mxu0 %v573
          %585 = vmatmul.bf16.gmra.mxu0 %v426
          %v586 = vpop.f32.mrf.mxu0
          %v587 = vadd.f32 %v563, %v586
          %v588 = vpop.f32.mrf.mxu0
          %589 = vdwg.mxu0
          %s590 = scalar_lea.vmem %s4, 32
          %v591 = vld [vmem:[%s590] sm:$0xf]
          %v592 = vld [vmem:[%s590 + $0x4] sm:$0xf]
          %v593 = vld [vmem:[%s590 + $0x8] sm:$0xf]
          %v594 = vld [vmem:[%s590 + $0xc] sm:$0xf]
          %s595 = scalar_lea.vmem %s7, 2
          %v596 = vld [vmem:[%s595] sm:$0x1]
          %v598 = vperm.slane %v596, 0
          %v604 = vunpack.c.l.b16 %v591
          %v605 = vunpack.c.l.b16 %v592
          %v606 = vunpack.c.l.b16 %v593
          %v607 = vunpack.c.l.b16 %v594
          %v608 = vpack.c.b16 %v605, %v604
          %v609 = vpack.c.b16 %v607, %v606
          %612 = vmatpush.bf16.msra.mxu0 0
          %613 = vmatpush.bf16.msra.mxu0 0
          %614 = vmatpush.bf16.msra.mxu0 0
          %615 = vmatpush.bf16.msra.mxu0 0
          %616 = vmatpush.bf16.msra.mxu0 0
          %617 = vmatpush.bf16.msra.mxu0 0
          %618 = vmatpush.bf16.msra.mxu0 %v609
          %619 = vmatpush.bf16.msra.mxu0 %v608
          %620 = vmatmul.bf16.gmra.mxu0 %v426
          %v621 = vpop.f32.mrf.mxu0
          %v622 = vadd.f32 %v598, %v621
          %v623 = vpop.f32.mrf.mxu0
          %624 = vdwg.mxu0
          %v625 = vpack.c.bf16 %v587, %v587
          %s626 = scalar_lea.vmem [#allocation2], 8
          %627 = vst.msk [vmem:[%s626] sm:$0xf] %vm475, %v625
          %v628 = vpack.c.bf16 %v622, %v622
          %s629 = scalar_lea.vmem [#allocation3], 8
          %630 = vst.msk [vmem:[%s629] sm:$0xf] %vm475, %v628
          %s631 = scalar_lea.vmem %s3, 48
          %v632 = vld [vmem:[%s631] sm:$0xf]
          %v633 = vld [vmem:[%s631 + $0x4] sm:$0xf]
          %v634 = vld [vmem:[%s631 + $0x8] sm:$0xf]
          %v635 = vld [vmem:[%s631 + $0xc] sm:$0xf]
          %s636 = scalar_lea.vmem %s6, 3
          %v637 = vld [vmem:[%s636] sm:$0x1]
          %v639 = vperm.slane %v637, 0
          %v645 = vunpack.c.l.b16 %v632
          %v646 = vunpack.c.l.b16 %v633
          %v647 = vunpack.c.l.b16 %v634
          %v648 = vunpack.c.l.b16 %v635
          %v649 = vpack.c.b16 %v646, %v645
          %v650 = vpack.c.b16 %v648, %v647
          %653 = vmatpush.bf16.msra.mxu0 0
          %654 = vmatpush.bf16.msra.mxu0 0
          %655 = vmatpush.bf16.msra.mxu0 0
          %656 = vmatpush.bf16.msra.mxu0 0
          %657 = vmatpush.bf16.msra.mxu0 0
          %658 = vmatpush.bf16.msra.mxu0 0
          %659 = vmatpush.bf16.msra.mxu0 %v650
          %660 = vmatpush.bf16.msra.mxu0 %v649
          %661 = vmatmul.bf16.gmra.mxu0 %v426
          %v662 = vpop.f32.mrf.mxu0
          %v663 = vadd.f32 %v639, %v662
          %v664 = vpop.f32.mrf.mxu0
          %665 = vdwg.mxu0
          %s666 = scalar_lea.vmem %s4, 48
          %v667 = vld [vmem:[%s666] sm:$0xf]
          %v668 = vld [vmem:[%s666 + $0x4] sm:$0xf]
          %v669 = vld [vmem:[%s666 + $0x8] sm:$0xf]
          %v670 = vld [vmem:[%s666 + $0xc] sm:$0xf]
          %s671 = scalar_lea.vmem %s7, 3
          %v672 = vld [vmem:[%s671] sm:$0x1]
          %v674 = vperm.slane %v672, 0
          %v680 = vunpack.c.l.b16 %v667
          %v681 = vunpack.c.l.b16 %v668
          %v682 = vunpack.c.l.b16 %v669
          %v683 = vunpack.c.l.b16 %v670
          %v684 = vpack.c.b16 %v681, %v680
          %v685 = vpack.c.b16 %v683, %v682
          %688 = vmatpush.bf16.msra.mxu0 0
          %689 = vmatpush.bf16.msra.mxu0 0
          %690 = vmatpush.bf16.msra.mxu0 0
          %691 = vmatpush.bf16.msra.mxu0 0
          %692 = vmatpush.bf16.msra.mxu0 0
          %693 = vmatpush.bf16.msra.mxu0 0
          %694 = vmatpush.bf16.msra.mxu0 %v685
          %695 = vmatpush.bf16.msra.mxu0 %v684
          %696 = vmatmul.bf16.gmra.mxu0 %v426
          %v697 = vpop.f32.mrf.mxu0
          %v698 = vadd.f32 %v674, %v697
          %v699 = vpop.f32.mrf.mxu0
          %700 = vdwg.mxu0
          %v701 = vpack.c.bf16 %v663, %v663
          %s702 = scalar_lea.vmem [#allocation2], 12
          %703 = vst.msk [vmem:[%s702] sm:$0xf] %vm475, %v701
          %v704 = vpack.c.bf16 %v698, %v698
          %s705 = scalar_lea.vmem [#allocation3], 12
          %706 = vst.msk [vmem:[%s705] sm:$0xf] %vm475, %v704
        $region64: #{tpu_custom_call.1} parent=59 // pred_fallthru
          _
        %v707 = vld [vmem:[%s392] sm:$0xff]
        %v708 = vpack.c.bf16 %v707, %v707
        %v709 = vld [vmem:[%s2] sm:$0xf]
        %v710 = vld [vmem:[%s2 + $0x4] sm:$0xf]
        %v711 = vld [vmem:[%s2 + $0x8] sm:$0xf]
        %v712 = vld [vmem:[%s2 + $0xc] sm:$0xf]
        %v713 = vld [vmem:[%s5] sm:$0x1]
        %v715 = vperm.slane %v713, 0
        %v721 = vunpack.c.l.b16 %v709
        %v722 = vunpack.c.l.b16 %v710
        %v723 = vunpack.c.l.b16 %v711
        %v724 = vunpack.c.l.b16 %v712
        %v725 = vpack.c.b16 %v722, %v721
        %v726 = vpack.c.b16 %v724, %v723
        %vm729 = vcmask 261120
        %v731 = vsel %vm729, %v708, 0
        %733 = vmatpush.bf16.msra.mxu0 0
        %734 = vmatpush.bf16.msra.mxu0 0
        %735 = vmatpush.bf16.msra.mxu0 0
        %736 = vmatpush.bf16.msra.mxu0 0
        %737 = vmatpush.bf16.msra.mxu0 0
        %738 = vmatpush.bf16.msra.mxu0 0
        %739 = vmatpush.bf16.msra.mxu0 %v726
        %740 = vmatpush.bf16.msra.mxu0 %v725
        %741 = vmatmul.bf16.gmra.mxu0 %v731
        %v742 = vpop.f32.mrf.mxu0
        %v743 = vadd.f32 %v715, %v742
        %v744 = vpop.f32.mrf.mxu0
        %745 = vdwg.mxu0
        %v746 = vpack.c.bf16 %v743, %v743
        %v747 = vld [vmem:[#allocation2] sm:$0xf]
        %v748 = vld [vmem:[#allocation3] sm:$0xf]
        %vm749 = vcmask 64512
        %v751 = vsel %vm749, %v746, 0
        %v754 = vsel %vm749, %v747, 0
        %756 = vmatpush.bf16.xpose.msra.mxu0 0
        %757 = vmatpush.bf16.xpose.msra.mxu0 0
        %758 = vmatpush.bf16.xpose.msra.mxu0 0
        %759 = vmatpush.bf16.xpose.msra.mxu0 0
        %760 = vmatpush.bf16.xpose.msra.mxu0 0
        %761 = vmatpush.bf16.xpose.msra.mxu0 0
        %762 = vmatpush.bf16.xpose.msra.mxu0 0
        %763 = vmatpush.bf16.xpose.msra.mxu0 %v754
        %764 = vmatmul.bf16.gmra.mxu0 %v751
        %v765 = vpop.f32.mrf.mxu0
        %v766 = vadd.f32 0.0, %v765
        %v767 = vpop.f32.mrf.mxu0
        %768 = vdwg.mxu0
        %v769 = vsel %vm749, %v766, -inf
        %770 = vmax.xlane.f32.xlu0 %v769
        %v771 = vpop.xlane.xlu0 %770
        %v772 = vsub.f32 %v766, %v771
        %v773 = vmul.f32 %v772, 1.442695
        %v774 = vpow.pop %v773
        %v775 = vsel %vm749, %v774, 0.0
        %776 = vadd.xlane.f32.xlu0 %v775
        %v777 = vpop.xlane.xlu0 %776
        %v778 = vpack.c.bf16 %v774, %v774
        %v780 = vsel %vm749, %v778, 0
        %vm782 = vcmask 1043456
        %v784 = vsel %vm782, %v748, 0
        %786 = vmatpush.bf16.msra.mxu0 0
        %787 = vmatpush.bf16.msra.mxu0 0
        %788 = vmatpush.bf16.msra.mxu0 0
        %789 = vmatpush.bf16.msra.mxu0 0
        %790 = vmatpush.bf16.msra.mxu0 0
        %791 = vmatpush.bf16.msra.mxu0 0
        %792 = vmatpush.bf16.msra.mxu0 0
        %793 = vmatpush.bf16.msra.mxu0 %v784
        %794 = vmatmul.bf16.gmra.mxu0 %v780
        %v795 = vpop.f32.mrf.mxu0
        %v796 = vadd.f32 0.0, %v795
        %v797 = vpop.f32.mrf.mxu0
        %798 = vdwg.mxu0
        %v799 = vrcp.pop %v777
        %v800 = vmul.f32 %v796, %v799
        %v801 = vpack.c.bf16 %v800, %v800
        %v802 = vld [vmem:[%s8] sm:$0xf]
        %s803 = scalar_lea.vmem %s2, 16
        %v804 = vld [vmem:[%s803] sm:$0xf]
        %v805 = vld [vmem:[%s803 + $0x4] sm:$0xf]
        %v806 = vld [vmem:[%s803 + $0x8] sm:$0xf]
        %v807 = vld [vmem:[%s803 + $0xc] sm:$0xf]
        %s808 = scalar_lea.vmem %s5, 1
        %v809 = vld [vmem:[%s808] sm:$0x1]
        %v811 = vperm.slane %v809, 0
        %v817 = vunpack.c.l.b16 %v804
        %v818 = vunpack.c.l.b16 %v805
        %v819 = vunpack.c.l.b16 %v806
        %v820 = vunpack.c.l.b16 %v807
        %v821 = vpack.c.b16 %v818, %v817
        %v822 = vpack.c.b16 %v820, %v819
        %825 = vmatpush.bf16.msra.mxu0 0
        %826 = vmatpush.bf16.msra.mxu0 0
        %827 = vmatpush.bf16.msra.mxu0 0
        %828 = vmatpush.bf16.msra.mxu0 0
        %829 = vmatpush.bf16.msra.mxu0 0
        %830 = vmatpush.bf16.msra.mxu0 0
        %831 = vmatpush.bf16.msra.mxu0 %v822
        %832 = vmatpush.bf16.msra.mxu0 %v821
        %833 = vmatmul.bf16.gmra.mxu0 %v731
        %v834 = vpop.f32.mrf.mxu0
        %v835 = vadd.f32 %v811, %v834
        %v836 = vpop.f32.mrf.mxu0
        %837 = vdwg.mxu0
        %v838 = vpack.c.bf16 %v835, %v835
        %s839 = scalar_lea.vmem [#allocation2], 4
        %v840 = vld [vmem:[%s839] sm:$0xf]
        %s841 = scalar_lea.vmem [#allocation3], 4
        %v842 = vld [vmem:[%s841] sm:$0xf]
        %v844 = vsel %vm749, %v838, 0
        %v847 = vsel %vm749, %v840, 0
        %849 = vmatpush.bf16.xpose.msra.mxu0 0
        %850 = vmatpush.bf16.xpose.msra.mxu0 0
        %851 = vmatpush.bf16.xpose.msra.mxu0 0
        %852 = vmatpush.bf16.xpose.msra.mxu0 0
        %853 = vmatpush.bf16.xpose.msra.mxu0 0
        %854 = vmatpush.bf16.xpose.msra.mxu0 0
        %855 = vmatpush.bf16.xpose.msra.mxu0 0
        %856 = vmatpush.bf16.xpose.msra.mxu0 %v847
        %857 = vmatmul.bf16.gmra.mxu0 %v844
        %v858 = vpop.f32.mrf.mxu0
        %v859 = vadd.f32 0.0, %v858
        %v860 = vpop.f32.mrf.mxu0
        %861 = vdwg.mxu0
        %v862 = vsel %vm749, %v859, -inf
        %863 = vmax.xlane.f32.xlu0 %v862
        %v864 = vpop.xlane.xlu0 %863
        %v865 = vsub.f32 %v859, %v864
        %v866 = vmul.f32 %v865, 1.442695
        %v867 = vpow.pop %v866
        %v868 = vsel %vm749, %v867, 0.0
        %869 = vadd.xlane.f32.xlu0 %v868
        %v870 = vpop.xlane.xlu0 %869
        %v871 = vpack.c.bf16 %v867, %v867
        %v873 = vsel %vm749, %v871, 0
        %v876 = vsel %vm782, %v842, 0
        %878 = vmatpush.bf16.msra.mxu0 0
        %879 = vmatpush.bf16.msra.mxu0 0
        %880 = vmatpush.bf16.msra.mxu0 0
        %881 = vmatpush.bf16.msra.mxu0 0
        %882 = vmatpush.bf16.msra.mxu0 0
        %883 = vmatpush.bf16.msra.mxu0 0
        %884 = vmatpush.bf16.msra.mxu0 0
        %885 = vmatpush.bf16.msra.mxu0 %v876
        %886 = vmatmul.bf16.gmra.mxu0 %v873
        %v887 = vpop.f32.mrf.mxu0
        %v888 = vadd.f32 0.0, %v887
        %v889 = vpop.f32.mrf.mxu0
        %890 = vdwg.mxu0
        %v891 = vrcp.pop %v870
        %v892 = vmul.f32 %v888, %v891
        %v893 = vpack.c.bf16 %v892, %v892
        %s894 = scalar_lea.vmem %s8, 4
        %v895 = vld [vmem:[%s894] sm:$0xf]
        %v897 = vsel %vm749, %v893, 0
        %v900 = vsel %vm782, %v895, 0
        %902 = vmatpush.bf16.msra.mxu0 0
        %903 = vmatpush.bf16.msra.mxu0 0
        %904 = vmatpush.bf16.msra.mxu0 0
        %905 = vmatpush.bf16.msra.mxu0 0
        %906 = vmatpush.bf16.msra.mxu0 0
        %907 = vmatpush.bf16.msra.mxu0 0
        %908 = vmatpush.bf16.msra.mxu0 0
        %909 = vmatpush.bf16.msra.mxu0 %v900
        %910 = vmatmul.bf16.gmra.mxu0 %v897
        %v911 = vpop.f32.mrf.mxu0
        %v912 = vadd.f32 0.0, %v911
        %v913 = vpop.f32.mrf.mxu0
        %914 = vdwg.mxu0
        %v916 = vsel %vm749, %v801, 0
        %v919 = vsel %vm782, %v802, 0
        %921 = vmatpush.bf16.msra.mxu0 0
        %922 = vmatpush.bf16.msra.mxu0 0
        %923 = vmatpush.bf16.msra.mxu0 0
        %924 = vmatpush.bf16.msra.mxu0 0
        %925 = vmatpush.bf16.msra.mxu0 0
        %926 = vmatpush.bf16.msra.mxu0 0
        %927 = vmatpush.bf16.msra.mxu0 0
        %928 = vmatpush.bf16.msra.mxu0 %v919
        %929 = vmatmul.bf16.gmra.mxu0 %v916
        %v930 = vpop.f32.mrf.mxu0
        %v931 = vadd.f32 %v912, %v930
        %v932 = vpop.f32.mrf.mxu0
        %933 = vdwg.mxu0
        %s934 = scalar_lea.vmem %s2, 32
        %v935 = vld [vmem:[%s934] sm:$0xf]
        %v936 = vld [vmem:[%s934 + $0x4] sm:$0xf]
        %v937 = vld [vmem:[%s934 + $0x8] sm:$0xf]
        %v938 = vld [vmem:[%s934 + $0xc] sm:$0xf]
        %s939 = scalar_lea.vmem %s5, 2
        %v940 = vld [vmem:[%s939] sm:$0x1]
        %v942 = vperm.slane %v940, 0
        %v948 = vunpack.c.l.b16 %v935
        %v949 = vunpack.c.l.b16 %v936
        %v950 = vunpack.c.l.b16 %v937
        %v951 = vunpack.c.l.b16 %v938
        %v952 = vpack.c.b16 %v949, %v948
        %v953 = vpack.c.b16 %v951, %v950
        %956 = vmatpush.bf16.msra.mxu0 0
        %957 = vmatpush.bf16.msra.mxu0 0
        %958 = vmatpush.bf16.msra.mxu0 0
        %959 = vmatpush.bf16.msra.mxu0 0
        %960 = vmatpush.bf16.msra.mxu0 0
        %961 = vmatpush.bf16.msra.mxu0 0
        %962 = vmatpush.bf16.msra.mxu0 %v953
        %963 = vmatpush.bf16.msra.mxu0 %v952
        %964 = vmatmul.bf16.gmra.mxu0 %v731
        %v965 = vpop.f32.mrf.mxu0
        %v966 = vadd.f32 %v942, %v965
        %v967 = vpop.f32.mrf.mxu0
        %968 = vdwg.mxu0
        %v969 = vpack.c.bf16 %v966, %v966
        %s970 = scalar_lea.vmem [#allocation2], 8
        %v971 = vld [vmem:[%s970] sm:$0xf]
        %s972 = scalar_lea.vmem [#allocation3], 8
        %v973 = vld [vmem:[%s972] sm:$0xf]
        %v975 = vsel %vm749, %v969, 0
        %v978 = vsel %vm749, %v971, 0
        %980 = vmatpush.bf16.xpose.msra.mxu0 0
        %981 = vmatpush.bf16.xpose.msra.mxu0 0
        %982 = vmatpush.bf16.xpose.msra.mxu0 0
        %983 = vmatpush.bf16.xpose.msra.mxu0 0
        %984 = vmatpush.bf16.xpose.msra.mxu0 0
        %985 = vmatpush.bf16.xpose.msra.mxu0 0
        %986 = vmatpush.bf16.xpose.msra.mxu0 0
        %987 = vmatpush.bf16.xpose.msra.mxu0 %v978
        %988 = vmatmul.bf16.gmra.mxu0 %v975
        %v989 = vpop.f32.mrf.mxu0
        %v990 = vadd.f32 0.0, %v989
        %v991 = vpop.f32.mrf.mxu0
        %992 = vdwg.mxu0
        %v993 = vsel %vm749, %v990, -inf
        %994 = vmax.xlane.f32.xlu0 %v993
        %v995 = vpop.xlane.xlu0 %994
        %v996 = vsub.f32 %v990, %v995
        %v997 = vmul.f32 %v996, 1.442695
        %v998 = vpow.pop %v997
        %v999 = vsel %vm749, %v998, 0.0
        %1000 = vadd.xlane.f32.xlu0 %v999
        %v1001 = vpop.xlane.xlu0 %1000
        %v1002 = vpack.c.bf16 %v998, %v998
        %v1004 = vsel %vm749, %v1002, 0
        %v1007 = vsel %vm782, %v973, 0
        %1009 = vmatpush.bf16.msra.mxu0 0
        %1010 = vmatpush.bf16.msra.mxu0 0
        %1011 = vmatpush.bf16.msra.mxu0 0
        %1012 = vmatpush.bf16.msra.mxu0 0
        %1013 = vmatpush.bf16.msra.mxu0 0
        %1014 = vmatpush.bf16.msra.mxu0 0
        %1015 = vmatpush.bf16.msra.mxu0 0
        %1016 = vmatpush.bf16.msra.mxu0 %v1007
        %1017 = vmatmul.bf16.gmra.mxu0 %v1004
        %v1018 = vpop.f32.mrf.mxu0
        %v1019 = vadd.f32 0.0, %v1018
        %v1020 = vpop.f32.mrf.mxu0
        %1021 = vdwg.mxu0
        %v1022 = vrcp.pop %v1001
        %v1023 = vmul.f32 %v1019, %v1022
        %v1024 = vpack.c.bf16 %v1023, %v1023
        %s1025 = scalar_lea.vmem %s8, 8
        %v1026 = vld [vmem:[%s1025] sm:$0xf]
        %v1028 = vsel %vm749, %v1024, 0
        %v1031 = vsel %vm782, %v1026, 0
        %1033 = vmatpush.bf16.msra.mxu0 0
        %1034 = vmatpush.bf16.msra.mxu0 0
        %1035 = vmatpush.bf16.msra.mxu0 0
        %1036 = vmatpush.bf16.msra.mxu0 0
        %1037 = vmatpush.bf16.msra.mxu0 0
        %1038 = vmatpush.bf16.msra.mxu0 0
        %1039 = vmatpush.bf16.msra.mxu0 0
        %1040 = vmatpush.bf16.msra.mxu0 %v1031
        %1041 = vmatmul.bf16.gmra.mxu0 %v1028
        %v1042 = vpop.f32.mrf.mxu0
        %v1043 = vadd.f32 0.0, %v1042
        %v1044 = vpop.f32.mrf.mxu0
        %1045 = vdwg.mxu0
        %v1046 = vadd.f32 %v931, %v1043
        %s1047 = scalar_lea.vmem %s2, 48
        %v1048 = vld [vmem:[%s1047] sm:$0xf]
        %v1049 = vld [vmem:[%s1047 + $0x4] sm:$0xf]
        %v1050 = vld [vmem:[%s1047 + $0x8] sm:$0xf]
        %v1051 = vld [vmem:[%s1047 + $0xc] sm:$0xf]
        %s1052 = scalar_lea.vmem %s5, 3
        %v1053 = vld [vmem:[%s1052] sm:$0x1]
        %v1055 = vperm.slane %v1053, 0
        %v1061 = vunpack.c.l.b16 %v1048
        %v1062 = vunpack.c.l.b16 %v1049
        %v1063 = vunpack.c.l.b16 %v1050
        %v1064 = vunpack.c.l.b16 %v1051
        %v1065 = vpack.c.b16 %v1062, %v1061
        %v1066 = vpack.c.b16 %v1064, %v1063
        %1069 = vmatpush.bf16.msra.mxu0 0
        %1070 = vmatpush.bf16.msra.mxu0 0
        %1071 = vmatpush.bf16.msra.mxu0 0
        %1072 = vmatpush.bf16.msra.mxu0 0
        %1073 = vmatpush.bf16.msra.mxu0 0
        %1074 = vmatpush.bf16.msra.mxu0 0
        %1075 = vmatpush.bf16.msra.mxu0 %v1066
        %1076 = vmatpush.bf16.msra.mxu0 %v1065
        %1077 = vmatmul.bf16.gmra.mxu0 %v731
        %v1078 = vpop.f32.mrf.mxu0
        %v1079 = vadd.f32 %v1055, %v1078
        %v1080 = vpop.f32.mrf.mxu0
        %1081 = vdwg.mxu0
        %v1082 = vpack.c.bf16 %v1079, %v1079
        %s1083 = scalar_lea.vmem [#allocation2], 12
        %v1084 = vld [vmem:[%s1083] sm:$0xf]
        %s1085 = scalar_lea.vmem [#allocation3], 12
        %v1086 = vld [vmem:[%s1085] sm:$0xf]
        %v1088 = vsel %vm749, %v1082, 0
        %v1091 = vsel %vm749, %v1084, 0
        %1093 = vmatpush.bf16.xpose.msra.mxu0 0
        %1094 = vmatpush.bf16.xpose.msra.mxu0 0
        %1095 = vmatpush.bf16.xpose.msra.mxu0 0
        %1096 = vmatpush.bf16.xpose.msra.mxu0 0
        %1097 = vmatpush.bf16.xpose.msra.mxu0 0
        %1098 = vmatpush.bf16.xpose.msra.mxu0 0
        %1099 = vmatpush.bf16.xpose.msra.mxu0 0
        %1100 = vmatpush.bf16.xpose.msra.mxu0 %v1091
        %1101 = vmatmul.bf16.gmra.mxu0 %v1088
        %v1102 = vpop.f32.mrf.mxu0
        %v1103 = vadd.f32 0.0, %v1102
        %v1104 = vpop.f32.mrf.mxu0
        %1105 = vdwg.mxu0
        %v1106 = vsel %vm749, %v1103, -inf
        %1107 = vmax.xlane.f32.xlu0 %v1106
        %v1108 = vpop.xlane.xlu0 %1107
        %v1109 = vsub.f32 %v1103, %v1108
        %v1110 = vmul.f32 %v1109, 1.442695
        %v1111 = vpow.pop %v1110
        %v1112 = vsel %vm749, %v1111, 0.0
        %1113 = vadd.xlane.f32.xlu0 %v1112
        %v1114 = vpop.xlane.xlu0 %1113
        %v1115 = vpack.c.bf16 %v1111, %v1111
        %v1117 = vsel %vm749, %v1115, 0
        %v1120 = vsel %vm782, %v1086, 0
        %1122 = vmatpush.bf16.msra.mxu0 0
        %1123 = vmatpush.bf16.msra.mxu0 0
        %1124 = vmatpush.bf16.msra.mxu0 0
        %1125 = vmatpush.bf16.msra.mxu0 0
        %1126 = vmatpush.bf16.msra.mxu0 0
        %1127 = vmatpush.bf16.msra.mxu0 0
        %1128 = vmatpush.bf16.msra.mxu0 0
        %1129 = vmatpush.bf16.msra.mxu0 %v1120
        %1130 = vmatmul.bf16.gmra.mxu0 %v1117
        %v1131 = vpop.f32.mrf.mxu0
        %v1132 = vadd.f32 0.0, %v1131
        %v1133 = vpop.f32.mrf.mxu0
        %1134 = vdwg.mxu0
        %v1135 = vrcp.pop %v1114
        %v1136 = vmul.f32 %v1132, %v1135
        %v1137 = vpack.c.bf16 %v1136, %v1136
        %s1138 = scalar_lea.vmem %s8, 12
        %v1139 = vld [vmem:[%s1138] sm:$0xf]
        %v1141 = vsel %vm749, %v1137, 0
        %v1144 = vsel %vm782, %v1139, 0
        %1146 = vmatpush.bf16.msra.mxu0 0
        %1147 = vmatpush.bf16.msra.mxu0 0
        %1148 = vmatpush.bf16.msra.mxu0 0
        %1149 = vmatpush.bf16.msra.mxu0 0
        %1150 = vmatpush.bf16.msra.mxu0 0
        %1151 = vmatpush.bf16.msra.mxu0 0
        %1152 = vmatpush.bf16.msra.mxu0 0
        %1153 = vmatpush.bf16.msra.mxu0 %v1144
        %1154 = vmatmul.bf16.gmra.mxu0 %v1141
        %v1155 = vpop.f32.mrf.mxu0
        %v1156 = vadd.f32 0.0, %v1155
        %v1157 = vpop.f32.mrf.mxu0
        %1158 = vdwg.mxu0
        %v1159 = vadd.f32 %v1046, %v1156
        %v1160 = vld [vmem:[%s9] sm:$0x1]
        %v1162 = vperm.slane %v1160, 0
        %v1164 = vadd.f32 %v1159, %v1162
        %1165 = vst.msk [vmem:[%s385] sm:$0xff] %vm729, %v1164
        %s1166 = sand.u32 %s268, 1
        %s1167 = scalar_lea.sflag [#allocation5], %s1166
        %s1168 = sand.u32 %s268, 1
        %s1169 = smul.addr %s1168, 8
        %s1170 = scalar_lea.vmem [#allocation4], %s1169
        // Predicated region
        $region65: #{tpu_custom_call.1} parent=59 // pred_check
          %p1171 = pneg %p278
        $region66: #{tpu_custom_call.1} parent=59 // pred_check_branch
          %1173 = sbr.rel (%p1171) target = $region68
        $region67: #{tpu_custom_call.1} parent=59 // pred_region
          %1175 = vsyncadd %s1167, 0
          %s1176 = sadd.s32 %s29, %s28
          %s1177 = smul.addr %s1176, 8
          %s1178 = scalar_lea.hbm %s10, %s1177
          %s1180 = sshll.u32 %s1170, 4
          %s1181 = int_to_ptr.vmem [resolvable:$true] %s1180
          %s1182 = sshll.u32 %s1178, 4
          %s1183 = int_to_ptr.hbm [resolvable:$true] %s1182
          %1185 = dma.vmem_to_hbm [thread:$0]  %s1181, 128, %s1183, %s1167
        $region68: #{tpu_custom_call.1} parent=59 // pred_fallthru
          _
      $region60: #{tpu_custom_call.1} parent=5 // pred_fallthru
        _
      %p1186 = scmp.le.s32.totalorder 2, %s19
      // Predicated region
      $region69: #{tpu_custom_call.1} parent=5 // pred_check
        %p1187 = pneg %p1186
      $region70: #{tpu_custom_call.1} parent=5 // pred_check_branch
        %1189 = sbr.rel (%p1187) target = $region72
      $region71: #{tpu_custom_call.1} parent=5 // pred_region
        %s1190 = ssub.s32 %s19, 2
        // Predicated region
        $region73: #{tpu_custom_call.1} parent=71 // pred_check
          %p1191 = pneg %p284
        $region74: #{tpu_custom_call.1} parent=71 // pred_check_branch
          %1193 = sbr.rel (%p1191) target = $region76
        $region75: #{tpu_custom_call.1} parent=71 // pred_region
          %s1194 = sand.u32 %s269, 1
          %s1195 = scalar_lea.sflag [#allocation5], %s1194
          %s1196 = sand.u32 %s269, 1
          %s1197 = smul.addr %s1196, 8
          %s1198 = scalar_lea.vmem [#allocation4], %s1197
          %1200 = dma.done %s1195, 128
        $region76: #{tpu_custom_call.1} parent=71 // pred_fallthru
          _
      $region72: #{tpu_custom_call.1} parent=5 // pred_fallthru
        _
    $region6: #{tpu_custom_call.1} parent=1 // loop_footer
      %s23 = sadd.s32 1, %s19
    $region7: #{tpu_custom_call.1} parent=1 // loop_footer_branch
      %18 = sbr.rel target = $region3
    $region8: #{tpu_custom_call.1} parent=1 // loop_exit
      _
    %1201 = vsyncpa [#allocation5], 1
    %s1202 = scalar_lea.sflag [#allocation5], 1
    %1203 = vsyncpa %s1202, 1

</llo_original>
